<compile_context>
chip_gen: v7x
topology: tpu7x:2x2x1
jax: 0.10.0
libtpu: 0.0.40
codegen_flags: <defaults>
</compile_context>

<pallas_src>
import math

import jax
import jax.numpy as jnp
from jax import lax
from jax.experimental import pallas as pl
from jax.experimental.pallas import tpu as pltpu

# Module hyper-parameters (from spaced_rep_gpt.py)
N_EMBED = 256
CTX_LEN = 256
DROPOUT_RATE = 0.25  # unused at eval time

_TQ_MAX = 128  # flash tile size along both query and kv axes


def _attention_head_kernel(x_ref, wqkv_ref, o_ref):
    """One batch element per grid step.

    x_ref    : (1, T, C)  VMEM, f32
    wqkv_ref : (3H, C)    VMEM, bf16 (PyTorch (out_features, in_features) layout)
    o_ref    : (1, T, H)  VMEM, f32
    """
    T = x_ref.shape[1]
    H = o_ref.shape[2]

    x = x_ref[0].astype(jnp.bfloat16)                      # (T, C) bf16
    w = wqkv_ref[...]                                      # (3H, C) bf16

    # Fused q/k/v projection: contract the C axis of both operands
    # (== x @ w.T == nn.Linear), one wide MXU pass, f32 accumulation.
    qkv = lax.dot_general(
        x, w, (((1,), (1,)), ((), ())),
        preferred_element_type=jnp.float32)                # (T, 3H) f32

    scale = 1.0 / math.sqrt(H)
    q = (qkv[:, 0:H] * scale).astype(jnp.bfloat16)         # scale folded into q once
    k = qkv[:, H:2 * H].astype(jnp.bfloat16)
    v = qkv[:, 2 * H:3 * H].astype(jnp.bfloat16)

    tq = min(T, _TQ_MAX)
    n_blk = T // tq

    # In-tile causal mask from broadcast iotas (no (T,T) i32 materialization).
    row_ids = lax.broadcasted_iota(jnp.int32, (tq, 1), 0)
    col_ids = lax.broadcasted_iota(jnp.int32, (1, tq), 1)
    diag_mask = col_ids <= row_ids                         # (tq, tq) bool

    # Static (unrolled) flash loop; kv blocks above the diagonal are skipped
    # entirely at trace time (causal block skipping).
    for qi in range(n_blk):
        q_t = q[qi * tq:(qi + 1) * tq]                     # (tq, H) bf16
        m_i = None
        l_i = None
        acc = None
        for ki in range(qi + 1):
            k_t = k[ki * tq:(ki + 1) * tq]                 # (tq, H) bf16
            v_t = v[ki * tq:(ki + 1) * tq]                 # (tq, H) bf16
            # q @ k^T without materializing a transpose of k.
            s = lax.dot_general(
                q_t, k_t, (((1,), (1,)), ((), ())),
                preferred_element_type=jnp.float32)        # (tq, tq) f32
            if ki == qi:                                   # diagonal tile only
                s = jnp.where(diag_mask, s, -jnp.inf)
            s_max = jnp.max(s, axis=-1, keepdims=True)
            if acc is None:                                # first kv block
                m_i = s_max
                p = jnp.exp(s - m_i)
                l_i = jnp.sum(p, axis=-1, keepdims=True)
                acc = jnp.dot(p.astype(jnp.bfloat16), v_t,
                              preferred_element_type=jnp.float32)
            else:                                          # online-softmax update
                m_new = jnp.maximum(m_i, s_max)
                alpha = jnp.exp(m_i - m_new)
                p = jnp.exp(s - m_new)
                l_i = alpha * l_i + jnp.sum(p, axis=-1, keepdims=True)
                acc = alpha * acc + jnp.dot(p.astype(jnp.bfloat16), v_t,
                                            preferred_element_type=jnp.float32)
                m_i = m_new
        inv_l = pl.reciprocal(l_i, approx=True)
        # dropout: identity (eval mode)
        o_ref[0, pl.ds(qi * tq, tq), :] = (acc * inv_l).astype(o_ref.dtype)


def attention_head(x, w_query, w_key, w_value):
    """x: (B, T, C) float32; w_*: (head_size, n_embed) float32 (PyTorch layout)."""
    B, T, C = x.shape
    H = w_query.shape[0]
    assert C == N_EMBED and T <= CTX_LEN
    assert T % 8 == 0 and (T <= _TQ_MAX or T % _TQ_MAX == 0)

    # Fused QKV weight, kept in PyTorch (out, in) = (3H, C) layout; the kernel
    # contracts the C axis directly so no weight transpose is ever materialized.
    wqkv = jnp.concatenate([w_query, w_key, w_value], axis=0).astype(jnp.bfloat16)

    return pl.pallas_call(
        _attention_head_kernel,
        out_shape=jax.ShapeDtypeStruct((B, T, H), x.dtype),
        grid_spec=pltpu.PrefetchScalarGridSpec(
            num_scalar_prefetch=0,
            grid=(B,),
            in_specs=[
                pl.BlockSpec((1, T, C), lambda b: (b, 0, 0)),
                pl.BlockSpec((3 * H, C), lambda b: (0, 0)),
            ],
            out_specs=pl.BlockSpec((1, T, H), lambda b: (b, 0, 0)),
        ),
        compiler_params=pltpu.CompilerParams(
            dimension_semantics=("parallel",),
        ),
    )(x, wqkv)


def attention_head_reference(x, w_query, w_key, w_value):
    """Pure-JAX f32 reference of the PyTorch forward (eval-mode dropout)."""
    q = x @ w_query.T
    k = x @ w_key.T
    v = x @ w_value.T
    wei = (q @ jnp.swapaxes(k, -2, -1)) * (k.shape[-1] ** -0.5)
    T = x.shape[1]
    tril = jnp.tril(jnp.ones((T, T), dtype=bool))
    wei = jnp.where(tril, wei, -jnp.inf)
    wei = jax.nn.softmax(wei, axis=-1)
    return wei @ v


if __name__ == "__main__":
    key = jax.random.PRNGKey(0)
    k_x, k_q, k_k, k_v = jax.random.split(key, 4)

    B, T = 2, 256          # T == ctx_len; exercises the causal block-skipping path
    C = N_EMBED            # 256
    head_size = 64

    x = jax.random.normal(k_x, (B, T, C), dtype=jnp.float32)

    # nn.Linear default init: U(-1/sqrt(in_features), 1/sqrt(in_features))
    bound = 1.0 / math.sqrt(N_EMBED)
    w_query = jax.random.uniform(k_q, (head_size, N_EMBED), jnp.float32, -bound, bound)
    w_key = jax.random.uniform(k_k, (head_size, N_EMBED), jnp.float32, -bound, bound)
    w_value = jax.random.uniform(k_v, (head_size, N_EMBED), jnp.float32, -bound, bound)

    out = attention_head(x, w_query, w_key, w_value)
    out = jax.block_until_ready(out)

    ref = attention_head_reference(x, w_query, w_key, w_value)
    ref = jax.block_until_ready(ref)

    assert out.shape == (B, T, head_size)
    # bf16 MXU operands (f32 accumulation) => loosened tolerance vs the f32 reference.
    assert jnp.allclose(out, ref, atol=2e-2, rtol=2e-2), "mismatch vs reference"

    print("KERNEL_OK")
</pallas_src>

<mosaic_0001>
module attributes {stable_mosaic.version = 11 : i64} {
  func.func @_attention_head_kernel(%arg0: i32, %arg1: memref<1x256x256xf32, #tpu.memory_space<vmem>>, %arg2: memref<192x256xbf16, #tpu.memory_space<vmem>>, %arg3: memref<1x256x64xf32, #tpu.memory_space<vmem>>) attributes {dimension_semantics = [#tpu.dimension_semantics<parallel>], iteration_bounds = array<i64: 2>, scalar_prefetch = 0 : i64, scratch_operands = 0 : i64, tpu.core_type = #tpu.core_type<tc>, window_params = [{transform_indices = @transform_0, window_bounds = array<i64: 1, 256, 256>}, {pipeline_mode = #tpu.pipeline_mode<synchronous>, transform_indices = @transform_1, window_bounds = array<i64: 192, 256>}, {transform_indices = @transform_2, window_bounds = array<i64: 1, 256, 64>}]} {
    %c0 = arith.constant 0 : index
    %c0_0 = arith.constant 0 : index
    %c0_1 = arith.constant 0 : index
    %0 = vector.load %arg1[%c0, %c0_0, %c0_1] : memref<1x256x256xf32, #tpu.memory_space<vmem>>, vector<1x256x256xf32>
    %1 = vector.shape_cast %0 : vector<1x256x256xf32> to vector<256x256xf32>
    %2 = arith.truncf %1 : vector<256x256xf32> to vector<256x256xbf16>
    %c0_2 = arith.constant 0 : index
    %c0_3 = arith.constant 0 : index
    %3 = vector.load %arg2[%c0_2, %c0_3] : memref<192x256xbf16, #tpu.memory_space<vmem>>, vector<192x256xbf16>
    %cst = arith.constant dense<0.000000e+00> : vector<256x192xf32>
    %4 = tpu.matmul %2, %3, %cst {dimension_numbers = #tpu.dot_dimension_numbers<[1], [1], [0], [0], [0, 0, 1, 0], [], []>} : vector<256x256xbf16>, vector<192x256xbf16>, vector<256x192xf32> -> vector<256x192xf32>
    %5 = vector.extract_strided_slice %4 {offsets = [0, 0], sizes = [256, 64], strides = [1, 1]} : vector<256x192xf32> to vector<256x64xf32>
    %cst_4 = arith.constant 1.250000e-01 : f32
    %6 = vector.broadcast %cst_4 : f32 to vector<256x64xf32>
    %7 = arith.mulf %5, %6 : vector<256x64xf32>
    %8 = arith.truncf %7 : vector<256x64xf32> to vector<256x64xbf16>
    %9 = vector.extract_strided_slice %4 {offsets = [0, 64], sizes = [256, 64], strides = [1, 1]} : vector<256x192xf32> to vector<256x64xf32>
    %10 = arith.truncf %9 : vector<256x64xf32> to vector<256x64xbf16>
    %11 = vector.extract_strided_slice %4 {offsets = [0, 128], sizes = [256, 64], strides = [1, 1]} : vector<256x192xf32> to vector<256x64xf32>
    %12 = arith.truncf %11 : vector<256x64xf32> to vector<256x64xbf16>
    %13 = tpu.iota {dimensions = array<i32: 0>} : vector<128x1xi32>
    %14 = tpu.iota {dimensions = array<i32: 1>} : vector<1x128xi32>
    %15 = vector.broadcast %14 : vector<1x128xi32> to vector<128x128xi32>
    %16 = vector.broadcast %13 : vector<128x1xi32> to vector<128x128xi32>
    %17 = arith.cmpi sle, %15, %16 : vector<128x128xi32>
    %18 = vector.extract_strided_slice %8 {offsets = [0, 0], sizes = [128, 64], strides = [1, 1]} : vector<256x64xbf16> to vector<128x64xbf16>
    %19 = vector.extract_strided_slice %10 {offsets = [0, 0], sizes = [128, 64], strides = [1, 1]} : vector<256x64xbf16> to vector<128x64xbf16>
    %20 = vector.extract_strided_slice %12 {offsets = [0, 0], sizes = [128, 64], strides = [1, 1]} : vector<256x64xbf16> to vector<128x64xbf16>
    %cst_5 = arith.constant dense<0.000000e+00> : vector<128x128xf32>
    %21 = tpu.matmul %18, %19, %cst_5 {dimension_numbers = #tpu.dot_dimension_numbers<[1], [1], [0], [0], [0, 0, 1, 0], [], []>} : vector<128x64xbf16>, vector<128x64xbf16>, vector<128x128xf32> -> vector<128x128xf32>
    %cst_6 = arith.constant 0xFF800000 : f32
    %22 = vector.broadcast %cst_6 : f32 to vector<128x128xf32>
    %23 = arith.select %17, %21, %22 : vector<128x128xi1>, vector<128x128xf32>
    %cst_7 = arith.constant dense<0xFF800000> : vector<128xf32>
    %24 = vector.multi_reduction <maximumf>, %23, %cst_7 [1] : vector<128x128xf32> to vector<128xf32>
    %25 = vector.shape_cast %24 : vector<128xf32> to vector<128x1xf32>
    %26 = vector.broadcast %25 : vector<128x1xf32> to vector<128x128xf32>
    %27 = arith.subf %23, %26 : vector<128x128xf32>
    %28 = math.exp %27 : vector<128x128xf32>
    %cst_8 = arith.constant dense<0.000000e+00> : vector<128xf32>
    %29 = vector.multi_reduction <add>, %28, %cst_8 [1] : vector<128x128xf32> to vector<128xf32>
    %30 = vector.shape_cast %29 : vector<128xf32> to vector<128x1xf32>
    %31 = arith.truncf %28 : vector<128x128xf32> to vector<128x128xbf16>
    %cst_9 = arith.constant dense<0.000000e+00> : vector<128x64xf32>
    %32 = tpu.matmul %31, %20, %cst_9 {dimension_numbers = #tpu.dot_dimension_numbers<[1], [0], [0], [1], [0, 0, 1, 1], [], []>} : vector<128x128xbf16>, vector<128x64xbf16>, vector<128x64xf32> -> vector<128x64xf32>
    %33 = tpu.reciprocal %30 {approx = true} : vector<128x1xf32> -> vector<128x1xf32>
    %34 = vector.broadcast %33 : vector<128x1xf32> to vector<128x64xf32>
    %35 = arith.mulf %32, %34 : vector<128x64xf32>
    %c0_10 = arith.constant 0 : index
    %c0_11 = arith.constant 0 : index
    %c0_12 = arith.constant 0 : index
    %36 = vector.load %arg3[%c0_10, %c0_11, %c0_12] : memref<1x256x64xf32, #tpu.memory_space<vmem>>, vector<1x128x64xf32>
    %37 = vector.shape_cast %36 : vector<1x128x64xf32> to vector<128x64xf32>
    %38 = vector.shape_cast %35 : vector<128x64xf32> to vector<1x128x64xf32>
    tpu.vector_store %arg3[%c0_10, %c0_11, %c0_12], %38 {strides = array<i32>} : memref<1x256x64xf32, #tpu.memory_space<vmem>>, vector<1x128x64xf32>,
    %39 = vector.extract_strided_slice %8 {offsets = [128, 0], sizes = [128, 64], strides = [1, 1]} : vector<256x64xbf16> to vector<128x64xbf16>
    %40 = vector.extract_strided_slice %10 {offsets = [0, 0], sizes = [128, 64], strides = [1, 1]} : vector<256x64xbf16> to vector<128x64xbf16>
    %41 = vector.extract_strided_slice %12 {offsets = [0, 0], sizes = [128, 64], strides = [1, 1]} : vector<256x64xbf16> to vector<128x64xbf16>
    %cst_13 = arith.constant dense<0.000000e+00> : vector<128x128xf32>
    %42 = tpu.matmul %39, %40, %cst_13 {dimension_numbers = #tpu.dot_dimension_numbers<[1], [1], [0], [0], [0, 0, 1, 0], [], []>} : vector<128x64xbf16>, vector<128x64xbf16>, vector<128x128xf32> -> vector<128x128xf32>
    %cst_14 = arith.constant dense<0xFF800000> : vector<128xf32>
    %43 = vector.multi_reduction <maximumf>, %42, %cst_14 [1] : vector<128x128xf32> to vector<128xf32>
    %44 = vector.shape_cast %43 : vector<128xf32> to vector<128x1xf32>
    %45 = vector.broadcast %44 : vector<128x1xf32> to vector<128x128xf32>
    %46 = arith.subf %42, %45 : vector<128x128xf32>
    %47 = math.exp %46 : vector<128x128xf32>
    %cst_15 = arith.constant dense<0.000000e+00> : vector<128xf32>
    %48 = vector.multi_reduction <add>, %47, %cst_15 [1] : vector<128x128xf32> to vector<128xf32>
    %49 = vector.shape_cast %48 : vector<128xf32> to vector<128x1xf32>
    %50 = arith.truncf %47 : vector<128x128xf32> to vector<128x128xbf16>
    %cst_16 = arith.constant dense<0.000000e+00> : vector<128x64xf32>
    %51 = tpu.matmul %50, %41, %cst_16 {dimension_numbers = #tpu.dot_dimension_numbers<[1], [0], [0], [1], [0, 0, 1, 1], [], []>} : vector<128x128xbf16>, vector<128x64xbf16>, vector<128x64xf32> -> vector<128x64xf32>
    %52 = vector.extract_strided_slice %10 {offsets = [128, 0], sizes = [128, 64], strides = [1, 1]} : vector<256x64xbf16> to vector<128x64xbf16>
    %53 = vector.extract_strided_slice %12 {offsets = [128, 0], sizes = [128, 64], strides = [1, 1]} : vector<256x64xbf16> to vector<128x64xbf16>
    %cst_17 = arith.constant dense<0.000000e+00> : vector<128x128xf32>
    %54 = tpu.matmul %39, %52, %cst_17 {dimension_numbers = #tpu.dot_dimension_numbers<[1], [1], [0], [0], [0, 0, 1, 0], [], []>} : vector<128x64xbf16>, vector<128x64xbf16>, vector<128x128xf32> -> vector<128x128xf32>
    %cst_18 = arith.constant 0xFF800000 : f32
    %55 = vector.broadcast %cst_18 : f32 to vector<128x128xf32>
    %56 = arith.select %17, %54, %55 : vector<128x128xi1>, vector<128x128xf32>
    %cst_19 = arith.constant dense<0xFF800000> : vector<128xf32>
    %57 = vector.multi_reduction <maximumf>, %56, %cst_19 [1] : vector<128x128xf32> to vector<128xf32>
    %58 = vector.shape_cast %57 : vector<128xf32> to vector<128x1xf32>
    %59 = arith.maximumf %44, %58 : vector<128x1xf32>
    %60 = arith.subf %44, %59 : vector<128x1xf32>
    %61 = math.exp %60 : vector<128x1xf32>
    %62 = vector.broadcast %59 : vector<128x1xf32> to vector<128x128xf32>
    %63 = arith.subf %56, %62 : vector<128x128xf32>
    %64 = math.exp %63 : vector<128x128xf32>
    %65 = arith.mulf %61, %49 : vector<128x1xf32>
    %cst_20 = arith.constant dense<0.000000e+00> : vector<128xf32>
    %66 = vector.multi_reduction <add>, %64, %cst_20 [1] : vector<128x128xf32> to vector<128xf32>
    %67 = vector.shape_cast %66 : vector<128xf32> to vector<128x1xf32>
    %68 = arith.addf %65, %67 : vector<128x1xf32>
    %69 = vector.broadcast %61 : vector<128x1xf32> to vector<128x64xf32>
    %70 = arith.mulf %69, %51 : vector<128x64xf32>
    %71 = arith.truncf %64 : vector<128x128xf32> to vector<128x128xbf16>
    %cst_21 = arith.constant dense<0.000000e+00> : vector<128x64xf32>
    %72 = tpu.matmul %71, %53, %cst_21 {dimension_numbers = #tpu.dot_dimension_numbers<[1], [0], [0], [1], [0, 0, 1, 1], [], []>} : vector<128x128xbf16>, vector<128x64xbf16>, vector<128x64xf32> -> vector<128x64xf32>
    %73 = arith.addf %70, %72 : vector<128x64xf32>
    %74 = tpu.reciprocal %68 {approx = true} : vector<128x1xf32> -> vector<128x1xf32>
    %75 = vector.broadcast %74 : vector<128x1xf32> to vector<128x64xf32>
    %76 = arith.mulf %73, %75 : vector<128x64xf32>
    %c0_22 = arith.constant 0 : index
    %c128 = arith.constant 128 : index
    %c0_23 = arith.constant 0 : index
    %77 = vector.load %arg3[%c0_22, %c128, %c0_23] : memref<1x256x64xf32, #tpu.memory_space<vmem>>, vector<1x128x64xf32>
    %78 = vector.shape_cast %77 : vector<1x128x64xf32> to vector<128x64xf32>
    %79 = vector.shape_cast %76 : vector<128x64xf32> to vector<1x128x64xf32>
    tpu.vector_store %arg3[%c0_22, %c128, %c0_23], %79 {strides = array<i32>} : memref<1x256x64xf32, #tpu.memory_space<vmem>>, vector<1x128x64xf32>,
    return
  }
  func.func @transform_0(%arg0: i32) -> (i32, i32, i32) {
    %c0_i32 = arith.constant 0 : i32
    %c0_i32_0 = arith.constant 0 : i32
    %c0_i32_1 = arith.constant 0 : i32
    return %arg0, %c0_i32, %c0_i32_0 : i32, i32, i32
  }
  func.func @transform_1(%arg0: i32) -> (i32, i32) {
    %c0_i32 = arith.constant 0 : i32
    %c0_i32_0 = arith.constant 0 : i32
    %c0_i32_1 = arith.constant 0 : i32
    return %c0_i32, %c0_i32_0 : i32, i32
  }
  func.func @transform_2(%arg0: i32) -> (i32, i32, i32) {
    %c0_i32 = arith.constant 0 : i32
    %c0_i32_0 = arith.constant 0 : i32
    %c0_i32_1 = arith.constant 0 : i32
    return %arg0, %c0_i32, %c0_i32_0 : i32, i32, i32
  }
}

</mosaic_0001>

<llo_original>
// kernel: tpu_custom_call.1
$region0: #{tpu_custom_call.1}
  #allocation0 [shape = 'u32[]', space=smem, size = 0x4, offset = 0x4, fixed_abs, tag = 'smem constant byte address 0x4 - core index']
  #allocation1 [shape = 'u32[144,128]{1,0:T(1,128)}', space=vmem, size = 0x12000, scoped, tag = 'internal scratch']
  %s0 = inlined_call_operand.hbm [shape: f32[2,256,256], index: 0, kind: input, shape index: {}]
  %s1 = inlined_call_operand.hbm [shape: bf16[192,256], index: 1, kind: input, shape index: {}]
  %s2 = inlined_call_operand.vmem [shape: f32[2,256,64], index: 2, kind: output, shape index: {}]
  %s3 = sld [smem:[#allocation0]]
  $region49: #{tpu_custom_call.1} parent=0
    _
  %s5 = ssub.s32 1, %s3
  %s6 = scalar_select 0, %s5, %s3
  $region1: #{tpu_custom_call.1} parent=0
    #allocation2 [shape = 'u8[524288]{0}', space=vmem, size = 0x80000, scoped, tag = 'input window, operand 0']
    #allocation3 [shape = 's32[2]{0}', space=sflag, size = 0x8, scoped, tag = 'scoped memory for tpu_custom_call.1']
    #allocation4 [shape = 'u8[98304]{0}', space=vmem, size = 0x18000, scoped, tag = 'input window, operand 1, single buffered']
    #allocation5 [shape = 's32[1]{0}', space=sflag, size = 0x4, scoped, tag = 'scoped memory for tpu_custom_call.1']
    %7 = vsyncpa [#allocation3], 0
    %s8 = scalar_lea.sflag [#allocation3], 1
    %9 = vsyncpa %s8, 0
    %10 = vsyncpa [#allocation5], 0
    loop: start=0, step=1, limit=4
    $region2: #{tpu_custom_call.1} parent=1 // loop_pre_header
      _
    $region3: #{tpu_custom_call.1} parent=1 // loop_header
      %s12 = sphi 0, %s16
      %p13 = scmp.ge.s32.totalorder %s12, 4
      %s22 = sphi 0, %s24
      %s25 = sphi 0, %s22
      %s26 = sphi 0, %s25
      %s42 = sphi 0, %s26
      %s46 = sphi 0, %s46
      %s48 = sphi 0, %s46
      %s49 = sphi 0, %s48
      %s63 = sphi 0, %s49
      %s69 = sphi 0, %s71
      %s72 = sphi 0, %s69
      %s73 = sphi 0, %s72
      %s89 = sphi 0, %s73
    $region4: #{tpu_custom_call.1} parent=1 // loop_header_branch
      %15 = sbr.rel (%p13) target = $region8
    $region5: #{tpu_custom_call.1} parent=1 // loop_body
      %s17 = ssub.s32 %s12, 1
      %s18 = ssub.s32 %s12, 2
      %s19 = sadd.s32 %s12, 1
      %s20 = ssub.s32 %s12, %s19
      %p21 = scmp.eq.s32.totalorder %s20, 0
      %s23 = sadd.s32 %s22, 1
      %s24 = scalar_select %p21, %s22, %s23
      %p27 = pneg %p21
      %p28 = scmp.eq.s32.totalorder %s12, 1
      %p29 = por %p27, %p28
      %p30 = scmp.ne.s32.totalorder %s22, %s25
      %p31 = scmp.eq.s32.totalorder %s12, 0
      %p32 = por %p30, %p31
      %p33 = scmp.ne.s32.totalorder %s22, %s25
      %p34 = scmp.eq.s32.totalorder %s17, 1
      %p35 = por %p33, %p34
      %p36 = scmp.ne.s32.totalorder %s25, %s26
      %p37 = scmp.eq.s32.totalorder %s17, 0
      %p38 = por %p36, %p37
      %p39 = scmp.ne.s32.totalorder %s25, %s26
      %p40 = scmp.eq.s32.totalorder %s18, 1
      %p41 = por %p39, %p40
      %p43 = scmp.ne.s32.totalorder %s26, %s42
      %p44 = scmp.eq.s32.totalorder %s18, 0
      %p45 = por %p43, %p44
      %s47 = sadd.s32 %s46, 1
      %p50 = scmp.eq.s32.totalorder %s12, 1
      %p51 = scmp.ne.s32.totalorder %s46, %s48
      %p52 = scmp.eq.s32.totalorder %s12, 0
      %p53 = por %p51, %p52
      %p54 = scmp.ne.s32.totalorder %s46, %s48
      %p55 = scmp.eq.s32.totalorder %s17, 1
      %p56 = por %p54, %p55
      %p57 = scmp.ne.s32.totalorder %s48, %s49
      %p58 = scmp.eq.s32.totalorder %s17, 0
      %p59 = por %p57, %p58
      %p60 = scmp.ne.s32.totalorder %s48, %s49
      %p61 = scmp.eq.s32.totalorder %s18, 1
      %p62 = por %p60, %p61
      %p64 = scmp.ne.s32.totalorder %s49, %s63
      %p65 = scmp.eq.s32.totalorder %s18, 0
      %p66 = por %p64, %p65
      %s67 = ssub.s32 %s12, %s19
      %p68 = scmp.eq.s32.totalorder %s67, 0
      %s70 = sadd.s32 %s69, 1
      %s71 = scalar_select %p68, %s69, %s70
      %p74 = pneg %p68
      %p75 = scmp.eq.s32.totalorder %s12, 1
      %p76 = por %p74, %p75
      %p77 = scmp.ne.s32.totalorder %s69, %s72
      %p78 = scmp.eq.s32.totalorder %s12, 0
      %p79 = por %p77, %p78
      %p80 = scmp.ne.s32.totalorder %s69, %s72
      %p81 = scmp.eq.s32.totalorder %s17, 1
      %p82 = por %p80, %p81
      %p83 = scmp.ne.s32.totalorder %s72, %s73
      %p84 = scmp.eq.s32.totalorder %s17, 0
      %p85 = por %p83, %p84
      %p86 = scmp.ne.s32.totalorder %s72, %s73
      %p87 = scmp.eq.s32.totalorder %s18, 1
      %p88 = por %p86, %p87
      %p90 = scmp.ne.s32.totalorder %s73, %s89
      %p91 = scmp.eq.s32.totalorder %s18, 0
      %p92 = por %p90, %p91
      %p93 = scmp.le.s32.totalorder 1, %s12
      %p94 = scmp.lt.s32.totalorder %s12, 3
      %p95 = pnand %p93, %p94
      %p96 = pneg %p95
      // Predicated region
      $region9: #{tpu_custom_call.1} parent=5 // pred_check
        _
      $region10: #{tpu_custom_call.1} parent=5 // pred_check_branch
        %98 = sbr.rel (%p95) target = $region12
      $region11: #{tpu_custom_call.1} parent=5 // pred_region
        %s99 = ssub.s32 %s12, 1
        // Predicated region
        $region13: #{tpu_custom_call.1} parent=11 // pred_check
          %p100 = pneg %p59
        $region14: #{tpu_custom_call.1} parent=11 // pred_check_branch
          %102 = sbr.rel (%p100) target = $region16
        $region15: #{tpu_custom_call.1} parent=11 // pred_region
          %s104 = ssub.s32 3072, 3072
          %105 = vsyncadd [#allocation5], %s104
          %s106 = sshll.u32 [#allocation4], 4
          %s107 = int_to_ptr.vmem [resolvable:$true] %s106
          %112 = dma.hbm_to_vmem [thread:$0]  %s1, 3072, %s107, [#allocation5], 128, 128, 8
        $region16: #{tpu_custom_call.1} parent=11 // pred_fallthru
          _
      $region12: #{tpu_custom_call.1} parent=5 // pred_fallthru
        _
      %p113 = scmp.lt.s32.totalorder %s12, 2
      // Predicated region
      $region17: #{tpu_custom_call.1} parent=5 // pred_check
        %p114 = pneg %p113
      $region18: #{tpu_custom_call.1} parent=5 // pred_check_branch
        %116 = sbr.rel (%p114) target = $region20
      $region19: #{tpu_custom_call.1} parent=5 // pred_region
        // Predicated region
        $region21: #{tpu_custom_call.1} parent=19 // pred_check
          %p117 = pneg %p32
        $region22: #{tpu_custom_call.1} parent=19 // pred_check_branch
          %119 = sbr.rel (%p117) target = $region24
        $region23: #{tpu_custom_call.1} parent=19 // pred_region
          %s120 = sand.u32 %s22, 1
          %s121 = scalar_lea.sflag [#allocation3], %s120
          %s122 = sand.u32 %s22, 1
          %s123 = smul.addr %s122, 512
          %s124 = scalar_lea.vmem [#allocation2], %s123
          %s126 = ssub.s32 8192, 8192
          %127 = vsyncadd %s121, %s126
          %s128 = smul.addr %s12, 64
          %s129 = smul.addr %s128, 128
          %s130 = scalar_lea.hbm %s0, %s129
          %s131 = sshll.u32 %s124, 4
          %s132 = int_to_ptr.vmem [resolvable:$true] %s131
          %137 = dma.hbm_to_vmem [thread:$0]  %s130, 8192, %s132, %s121, 256, 256, 16
        $region24: #{tpu_custom_call.1} parent=19 // pred_fallthru
          _
      $region20: #{tpu_custom_call.1} parent=5 // pred_fallthru
        _
      %p138 = scmp.le.s32.totalorder 1, %s12
      %p139 = scmp.lt.s32.totalorder %s12, 3
      %p140 = pnand %p138, %p139
      %p141 = pneg %p140
      // Predicated region
      $region25: #{tpu_custom_call.1} parent=5 // pred_check
        _
      $region26: #{tpu_custom_call.1} parent=5 // pred_check_branch
        %143 = sbr.rel (%p140) target = $region28
      $region27: #{tpu_custom_call.1} parent=5 // pred_region
        %s144 = ssub.s32 %s12, 1
        %s145 = sand.u32 %s25, 1
        %s146 = scalar_lea.sflag [#allocation3], %s145
        %s147 = sand.u32 %s25, 1
        %s148 = smul.addr %s147, 512
        %s149 = scalar_lea.vmem [#allocation2], %s148
        // Predicated region
        $region29: #{tpu_custom_call.1} parent=27 // pred_check
          %p150 = pneg %p38
        $region30: #{tpu_custom_call.1} parent=27 // pred_check_branch
          %152 = sbr.rel (%p150) target = $region32
        $region31: #{tpu_custom_call.1} parent=27 // pred_region
          %153 = dma.done %s146, 8192
        $region32: #{tpu_custom_call.1} parent=27 // pred_fallthru
          _
        // Predicated region
        $region33: #{tpu_custom_call.1} parent=27 // pred_check
          %p154 = pneg %p59
        $region34: #{tpu_custom_call.1} parent=27 // pred_check_branch
          %156 = sbr.rel (%p154) target = $region36
        $region35: #{tpu_custom_call.1} parent=27 // pred_region
          %157 = dma.done [#allocation5], 3072
        $region36: #{tpu_custom_call.1} parent=27 // pred_fallthru
          _
        %s158 = sand.u32 %s25, 1
        %s159 = scalar_lea.sflag [#allocation3], %s158
        %s160 = sand.u32 %s25, 1
        %s161 = smul.addr %s160, 512
        %s162 = scalar_lea.vmem [#allocation2], %s161
        %p163 = pneg %p38
        %p164 = pneg %p35
        %p165 = pneg %p59
        %p166 = pneg %p56
        %p167 = pneg %p85
        %p168 = pneg %p82
        %p169 = scmp.lt.s32.totalorder %s17, 1
        %s170 = scalar_select %p169, %s17, 1
        %s171 = smul.addr %s170, 32
        %s172 = smul.addr %s171, 8
        %s173 = scalar_lea.vmem %s2, %s172
        %p174 = scmp.lt.s32.totalorder %s17, 1
        %s175 = scalar_select %p174, %s17, 1
        %s176 = smul.addr %s175, 32
        %s177 = smul.addr %s176, 8
        %s178 = scalar_lea.vmem %s2, %s177
        %v180 = vld [vmem:[%s149] sm:$0xff]
        %v181 = vld [vmem:[%s149 + $0x8] sm:$0xff]
        %v182 = vld [vmem:[%s149 + $0x10] sm:$0xff]
        %v183 = vld [vmem:[%s149 + $0x18] sm:$0xff]
        %v184 = vld [vmem:[%s149 + $0x20] sm:$0xff]
        %v185 = vld [vmem:[%s149 + $0x28] sm:$0xff]
        %v186 = vld [vmem:[%s149 + $0x30] sm:$0xff]
        %v187 = vld [vmem:[%s149 + $0x38] sm:$0xff]
        %v188 = vld [vmem:[%s149 + $0x40] sm:$0xff]
        %v189 = vld [vmem:[%s149 + $0x48] sm:$0xff]
        %v190 = vld [vmem:[%s149 + $0x50] sm:$0xff]
        %v191 = vld [vmem:[%s149 + $0x58] sm:$0xff]
        %v192 = vld [vmem:[%s149 + $0x60] sm:$0xff]
        %v193 = vld [vmem:[%s149 + $0x68] sm:$0xff]
        %v194 = vld [vmem:[%s149 + $0x70] sm:$0xff]
        %v195 = vld [vmem:[%s149 + $0x78] sm:$0xff]
        %v196 = vld [vmem:[%s149 + $0x80] sm:$0xff]
        %v197 = vld [vmem:[%s149 + $0x88] sm:$0xff]
        %v198 = vld [vmem:[%s149 + $0x90] sm:$0xff]
        %v199 = vld [vmem:[%s149 + $0x98] sm:$0xff]
        %v200 = vld [vmem:[%s149 + $0xa0] sm:$0xff]
        %v201 = vld [vmem:[%s149 + $0xa8] sm:$0xff]
        %v202 = vld [vmem:[%s149 + $0xb0] sm:$0xff]
        %v203 = vld [vmem:[%s149 + $0xb8] sm:$0xff]
        %v204 = vld [vmem:[%s149 + $0xc0] sm:$0xff]
        %v205 = vld [vmem:[%s149 + $0xc8] sm:$0xff]
        %v206 = vld [vmem:[%s149 + $0xd0] sm:$0xff]
        %v207 = vld [vmem:[%s149 + $0xd8] sm:$0xff]
        %v208 = vld [vmem:[%s149 + $0xe0] sm:$0xff]
        %v209 = vld [vmem:[%s149 + $0xe8] sm:$0xff]
        %v210 = vld [vmem:[%s149 + $0xf0] sm:$0xff]
        %v211 = vld [vmem:[%s149 + $0xf8] sm:$0xff]
        %v212 = vld [vmem:[%s149 + $0x100] sm:$0xff]
        %v213 = vld [vmem:[%s149 + $0x108] sm:$0xff]
        %v214 = vld [vmem:[%s149 + $0x110] sm:$0xff]
        %v215 = vld [vmem:[%s149 + $0x118] sm:$0xff]
        %v216 = vld [vmem:[%s149 + $0x120] sm:$0xff]
        %v217 = vld [vmem:[%s149 + $0x128] sm:$0xff]
        %v218 = vld [vmem:[%s149 + $0x130] sm:$0xff]
        %v219 = vld [vmem:[%s149 + $0x138] sm:$0xff]
        %v220 = vld [vmem:[%s149 + $0x140] sm:$0xff]
        %v221 = vld [vmem:[%s149 + $0x148] sm:$0xff]
        %v222 = vld [vmem:[%s149 + $0x150] sm:$0xff]
        %v223 = vld [vmem:[%s149 + $0x158] sm:$0xff]
        %v224 = vld [vmem:[%s149 + $0x160] sm:$0xff]
        %v225 = vld [vmem:[%s149 + $0x168] sm:$0xff]
        %v226 = vld [vmem:[%s149 + $0x170] sm:$0xff]
        %v227 = vld [vmem:[%s149 + $0x178] sm:$0xff]
        %v228 = vld [vmem:[%s149 + $0x180] sm:$0xff]
        %v229 = vld [vmem:[%s149 + $0x188] sm:$0xff]
        %v230 = vld [vmem:[%s149 + $0x190] sm:$0xff]
        %v231 = vld [vmem:[%s149 + $0x198] sm:$0xff]
        %v232 = vld [vmem:[%s149 + $0x1a0] sm:$0xff]
        %v233 = vld [vmem:[%s149 + $0x1a8] sm:$0xff]
        %v234 = vld [vmem:[%s149 + $0x1b0] sm:$0xff]
        %v235 = vld [vmem:[%s149 + $0x1b8] sm:$0xff]
        %v236 = vld [vmem:[%s149 + $0x1c0] sm:$0xff]
        %v237 = vld [vmem:[%s149 + $0x1c8] sm:$0xff]
        %v238 = vld [vmem:[%s149 + $0x1d0] sm:$0xff]
        %v239 = vld [vmem:[%s149 + $0x1d8] sm:$0xff]
        %v240 = vld [vmem:[%s149 + $0x1e0] sm:$0xff]
        %v241 = vld [vmem:[%s149 + $0x1e8] sm:$0xff]
        %v242 = vld [vmem:[%s149 + $0x1f0] sm:$0xff]
        %v243 = vld [vmem:[%s149 + $0x1f8] sm:$0xff]
        %v244 = vpack.c.bf16 %v182, %v180
        %v245 = vpack.c.bf16 %v183, %v181
        %v246 = vpack.c.bf16 %v186, %v184
        %v247 = vpack.c.bf16 %v187, %v185
        %v248 = vpack.c.bf16 %v190, %v188
        %v249 = vpack.c.bf16 %v191, %v189
        %v250 = vpack.c.bf16 %v194, %v192
        %v251 = vpack.c.bf16 %v195, %v193
        %v252 = vpack.c.bf16 %v198, %v196
        %v253 = vpack.c.bf16 %v199, %v197
        %v254 = vpack.c.bf16 %v202, %v200
        %v255 = vpack.c.bf16 %v203, %v201
        %v256 = vpack.c.bf16 %v206, %v204
        %v257 = vpack.c.bf16 %v207, %v205
        %v258 = vpack.c.bf16 %v210, %v208
        %v259 = vpack.c.bf16 %v211, %v209
        %v260 = vpack.c.bf16 %v214, %v212
        %v261 = vpack.c.bf16 %v215, %v213
        %v262 = vpack.c.bf16 %v218, %v216
        %v263 = vpack.c.bf16 %v219, %v217
        %v264 = vpack.c.bf16 %v222, %v220
        %v265 = vpack.c.bf16 %v223, %v221
        %v266 = vpack.c.bf16 %v226, %v224
        %v267 = vpack.c.bf16 %v227, %v225
        %v268 = vpack.c.bf16 %v230, %v228
        %v269 = vpack.c.bf16 %v231, %v229
        %v270 = vpack.c.bf16 %v234, %v232
        %v271 = vpack.c.bf16 %v235, %v233
        %v272 = vpack.c.bf16 %v238, %v236
        %v273 = vpack.c.bf16 %v239, %v237
        %v274 = vpack.c.bf16 %v242, %v240
        %v275 = vpack.c.bf16 %v243, %v241
        %v276 = vld [vmem:[#allocation4] sm:$0xff]
        %v277 = vld [vmem:[#allocation4 + $0x8] sm:$0xff]
        %v278 = vld [vmem:[#allocation4 + $0x10] sm:$0xff]
        %v279 = vld [vmem:[#allocation4 + $0x18] sm:$0xff]
        %v280 = vld [vmem:[#allocation4 + $0x20] sm:$0xff]
        %v281 = vld [vmem:[#allocation4 + $0x28] sm:$0xff]
        %v282 = vld [vmem:[#allocation4 + $0x30] sm:$0xff]
        %v283 = vld [vmem:[#allocation4 + $0x38] sm:$0xff]
        %v284 = vld [vmem:[#allocation4 + $0x40] sm:$0xff]
        %v285 = vld [vmem:[#allocation4 + $0x48] sm:$0xff]
        %v286 = vld [vmem:[#allocation4 + $0x50] sm:$0xff]
        %v287 = vld [vmem:[#allocation4 + $0x58] sm:$0xff]
        %v288 = vld [vmem:[#allocation4 + $0x60] sm:$0xff]
        %v289 = vld [vmem:[#allocation4 + $0x68] sm:$0xff]
        %v290 = vld [vmem:[#allocation4 + $0x70] sm:$0xff]
        %v291 = vld [vmem:[#allocation4 + $0x78] sm:$0xff]
        %v292 = vld [vmem:[#allocation4 + $0x80] sm:$0xff]
        %v293 = vld [vmem:[#allocation4 + $0x88] sm:$0xff]
        %v294 = vld [vmem:[#allocation4 + $0x90] sm:$0xff]
        %v295 = vld [vmem:[#allocation4 + $0x98] sm:$0xff]
        %v296 = vld [vmem:[#allocation4 + $0xa0] sm:$0xff]
        %v297 = vld [vmem:[#allocation4 + $0xa8] sm:$0xff]
        %v298 = vld [vmem:[#allocation4 + $0xb0] sm:$0xff]
        %v299 = vld [vmem:[#allocation4 + $0xb8] sm:$0xff]
        %v324 = vunpack.c.l.b16 %v276
        %v325 = vunpack.c.h.b16 %v276
        %v326 = vunpack.c.l.b16 %v277
        %v327 = vunpack.c.h.b16 %v277
        %v328 = vunpack.c.l.b16 %v278
        %v329 = vunpack.c.h.b16 %v278
        %v330 = vunpack.c.l.b16 %v279
        %v331 = vunpack.c.h.b16 %v279
        %v332 = vunpack.c.l.b16 %v280
        %v333 = vunpack.c.h.b16 %v280
        %v334 = vunpack.c.l.b16 %v281
        %v335 = vunpack.c.h.b16 %v281
        %v336 = vunpack.c.l.b16 %v282
        %v337 = vunpack.c.h.b16 %v282
        %v338 = vunpack.c.l.b16 %v283
        %v339 = vunpack.c.h.b16 %v283
        %v340 = vunpack.c.l.b16 %v284
        %v341 = vunpack.c.h.b16 %v284
        %v342 = vunpack.c.l.b16 %v285
        %v343 = vunpack.c.h.b16 %v285
        %v344 = vunpack.c.l.b16 %v286
        %v345 = vunpack.c.h.b16 %v286
        %v346 = vunpack.c.l.b16 %v287
        %v347 = vunpack.c.h.b16 %v287
        %v348 = vunpack.c.l.b16 %v288
        %v349 = vunpack.c.h.b16 %v288
        %v350 = vunpack.c.l.b16 %v289
        %v351 = vunpack.c.h.b16 %v289
        %v352 = vunpack.c.l.b16 %v290
        %v353 = vunpack.c.h.b16 %v290
        %v354 = vunpack.c.l.b16 %v291
        %v355 = vunpack.c.h.b16 %v291
        %v356 = vunpack.c.l.b16 %v292
        %v357 = vunpack.c.h.b16 %v292
        %v358 = vunpack.c.l.b16 %v293
        %v359 = vunpack.c.h.b16 %v293
        %v360 = vunpack.c.l.b16 %v294
        %v361 = vunpack.c.h.b16 %v294
        %v362 = vunpack.c.l.b16 %v295
        %v363 = vunpack.c.h.b16 %v295
        %v364 = vunpack.c.l.b16 %v296
        %v365 = vunpack.c.h.b16 %v296
        %v366 = vunpack.c.l.b16 %v297
        %v367 = vunpack.c.h.b16 %v297
        %v368 = vunpack.c.l.b16 %v298
        %v369 = vunpack.c.h.b16 %v298
        %v370 = vunpack.c.l.b16 %v299
        %v371 = vunpack.c.h.b16 %v299
        %v372 = vpack.c.b16 %v326, %v324
        %v373 = vpack.c.b16 %v327, %v325
        %v374 = vpack.c.b16 %v330, %v328
        %v375 = vpack.c.b16 %v331, %v329
        %v376 = vpack.c.b16 %v334, %v332
        %v377 = vpack.c.b16 %v335, %v333
        %v378 = vpack.c.b16 %v338, %v336
        %v379 = vpack.c.b16 %v339, %v337
        %v380 = vpack.c.b16 %v342, %v340
        %v381 = vpack.c.b16 %v343, %v341
        %v382 = vpack.c.b16 %v346, %v344
        %v383 = vpack.c.b16 %v347, %v345
        %v384 = vpack.c.b16 %v350, %v348
        %v385 = vpack.c.b16 %v351, %v349
        %v386 = vpack.c.b16 %v354, %v352
        %v387 = vpack.c.b16 %v355, %v353
        %v388 = vpack.c.b16 %v358, %v356
        %v389 = vpack.c.b16 %v359, %v357
        %v390 = vpack.c.b16 %v362, %v360
        %v391 = vpack.c.b16 %v363, %v361
        %v392 = vpack.c.b16 %v366, %v364
        %v393 = vpack.c.b16 %v367, %v365
        %v394 = vpack.c.b16 %v370, %v368
        %v395 = vpack.c.b16 %v371, %v369
        %420 = vmatprep.subr.bf16.mxu0 %v373
        %421 = vmatpush1.bf16.xpose.msra.mxu0 %v372
        %422 = vmatprep.subr.bf16.mxu0 %v375
        %423 = vmatpush1.bf16.xpose.msra.mxu0 %v374
        %424 = vmatprep.subr.bf16.mxu0 %v377
        %425 = vmatpush1.bf16.xpose.msra.mxu0 %v376
        %426 = vmatprep.subr.bf16.mxu0 %v379
        %427 = vmatpush1.bf16.xpose.msra.mxu0 %v378
        %428 = vmatprep.subr.bf16.mxu0 %v381
        %429 = vmatpush1.bf16.xpose.msra.mxu0 %v380
        %430 = vmatprep.subr.bf16.mxu0 %v383
        %431 = vmatpush1.bf16.xpose.msra.mxu0 %v382
        %432 = vmatprep.subr.bf16.mxu0 %v385
        %433 = vmatpush1.bf16.xpose.msra.mxu0 %v384
        %434 = vmatprep.subr.bf16.mxu0 %v387
        %435 = vmatpush1.bf16.xpose.msra.mxu0 %v386
        %436 = vmatprep.subr.bf16.mxu0 %v389
        %437 = vmatpush1.bf16.xpose.msra.mxu0 %v388
        %438 = vmatprep.subr.bf16.mxu0 %v391
        %439 = vmatpush1.bf16.xpose.msra.mxu0 %v390
        %440 = vmatprep.subr.bf16.mxu0 %v393
        %441 = vmatpush1.bf16.xpose.msra.mxu0 %v392
        %442 = vmatprep.subr.bf16.mxu0 %v395
        %443 = vmatpush1.bf16.xpose.msra.mxu0 %v394
        %444 = vmatprep.subr.bf16.mxu0 0
        %445 = vmatpush1.bf16.xpose.msra.mxu0 0
        %446 = vmatprep.subr.bf16.mxu0 0
        %447 = vmatpush1.bf16.xpose.msra.mxu0 0
        %448 = vmatprep.subr.bf16.mxu0 0
        %449 = vmatpush1.bf16.xpose.msra.mxu0 0
        %450 = vmatprep.subr.bf16.mxu0 0
        %451 = vmatpush1.bf16.xpose.msra.mxu0 0
        %452 = vmatprep.mubr.bf16.mxu0 %v245
        %453 = vmatmul.mubr.bf16.gmra.mrb[0].mxu0 %v244
        %v454 = vpop.f32.mrb[0].mxu0
        %v455 = vadd.f32 0.0, %v454
        %v456 = vpop.f32.mrb[0].mxu0
        %v457 = vadd.f32 0.0, %v456
        %v458 = vpop.f32.mrb[0].mxu0
        %v459 = vadd.f32 0.0, %v458
        %v460 = vpop.f32.mrb[0].mxu0
        %v461 = vadd.f32 0.0, %v460
        %462 = vmatprep.mubr.bf16.mxu0 %v247
        %463 = vmatmul.mubr.bf16.gmra.mrb[0].mxu0 %v246
        %v464 = vpop.f32.mrb[0].mxu0
        %v465 = vadd.f32 0.0, %v464
        %v466 = vpop.f32.mrb[0].mxu0
        %v467 = vadd.f32 0.0, %v466
        %v468 = vpop.f32.mrb[0].mxu0
        %v469 = vadd.f32 0.0, %v468
        %v470 = vpop.f32.mrb[0].mxu0
        %v471 = vadd.f32 0.0, %v470
        %472 = vmatprep.mubr.bf16.mxu0 %v249
        %473 = vmatmul.mubr.bf16.gmra.mrb[0].mxu0 %v248
        %v474 = vpop.f32.mrb[0].mxu0
        %v475 = vadd.f32 0.0, %v474
        %v476 = vpop.f32.mrb[0].mxu0
        %v477 = vadd.f32 0.0, %v476
        %v478 = vpop.f32.mrb[0].mxu0
        %v479 = vadd.f32 0.0, %v478
        %v480 = vpop.f32.mrb[0].mxu0
        %v481 = vadd.f32 0.0, %v480
        %482 = vmatprep.mubr.bf16.mxu0 %v251
        %483 = vmatmul.mubr.bf16.gmra.mrb[0].mxu0 %v250
        %v484 = vpop.f32.mrb[0].mxu0
        %v485 = vadd.f32 0.0, %v484
        %v486 = vpop.f32.mrb[0].mxu0
        %v487 = vadd.f32 0.0, %v486
        %v488 = vpop.f32.mrb[0].mxu0
        %v489 = vadd.f32 0.0, %v488
        %v490 = vpop.f32.mrb[0].mxu0
        %v491 = vadd.f32 0.0, %v490
        %492 = vmatprep.mubr.bf16.mxu0 %v253
        %493 = vmatmul.mubr.bf16.gmra.mrb[0].mxu0 %v252
        %v494 = vpop.f32.mrb[0].mxu0
        %v495 = vadd.f32 0.0, %v494
        %v496 = vpop.f32.mrb[0].mxu0
        %v497 = vadd.f32 0.0, %v496
        %v498 = vpop.f32.mrb[0].mxu0
        %v499 = vadd.f32 0.0, %v498
        %v500 = vpop.f32.mrb[0].mxu0
        %v501 = vadd.f32 0.0, %v500
        %502 = vmatprep.mubr.bf16.mxu0 %v255
        %503 = vmatmul.mubr.bf16.gmra.mrb[0].mxu0 %v254
        %v504 = vpop.f32.mrb[0].mxu0
        %v505 = vadd.f32 0.0, %v504
        %v506 = vpop.f32.mrb[0].mxu0
        %v507 = vadd.f32 0.0, %v506
        %v508 = vpop.f32.mrb[0].mxu0
        %v509 = vadd.f32 0.0, %v508
        %v510 = vpop.f32.mrb[0].mxu0
        %v511 = vadd.f32 0.0, %v510
        %512 = vmatprep.mubr.bf16.mxu0 %v257
        %513 = vmatmul.mubr.bf16.gmra.mrb[0].mxu0 %v256
        %v514 = vpop.f32.mrb[0].mxu0
        %v515 = vadd.f32 0.0, %v514
        %v516 = vpop.f32.mrb[0].mxu0
        %v517 = vadd.f32 0.0, %v516
        %v518 = vpop.f32.mrb[0].mxu0
        %v519 = vadd.f32 0.0, %v518
        %v520 = vpop.f32.mrb[0].mxu0
        %v521 = vadd.f32 0.0, %v520
        %522 = vmatprep.mubr.bf16.mxu0 %v259
        %523 = vmatmul.mubr.bf16.gmra.mrb[0].mxu0 %v258
        %v524 = vpop.f32.mrb[0].mxu0
        %v525 = vadd.f32 0.0, %v524
        %v526 = vpop.f32.mrb[0].mxu0
        %v527 = vadd.f32 0.0, %v526
        %v528 = vpop.f32.mrb[0].mxu0
        %v529 = vadd.f32 0.0, %v528
        %v530 = vpop.f32.mrb[0].mxu0
        %v531 = vadd.f32 0.0, %v530
        %532 = vmatprep.mubr.bf16.mxu0 %v261
        %533 = vmatmul.mubr.bf16.gmra.mrb[0].mxu0 %v260
        %v534 = vpop.f32.mrb[0].mxu0
        %v535 = vadd.f32 0.0, %v534
        %v536 = vpop.f32.mrb[0].mxu0
        %v537 = vadd.f32 0.0, %v536
        %v538 = vpop.f32.mrb[0].mxu0
        %v539 = vadd.f32 0.0, %v538
        %v540 = vpop.f32.mrb[0].mxu0
        %v541 = vadd.f32 0.0, %v540
        %542 = vmatprep.mubr.bf16.mxu0 %v263
        %543 = vmatmul.mubr.bf16.gmra.mrb[0].mxu0 %v262
        %v544 = vpop.f32.mrb[0].mxu0
        %v545 = vadd.f32 0.0, %v544
        %v546 = vpop.f32.mrb[0].mxu0
        %v547 = vadd.f32 0.0, %v546
        %v548 = vpop.f32.mrb[0].mxu0
        %v549 = vadd.f32 0.0, %v548
        %v550 = vpop.f32.mrb[0].mxu0
        %v551 = vadd.f32 0.0, %v550
        %552 = vmatprep.mubr.bf16.mxu0 %v265
        %553 = vmatmul.mubr.bf16.gmra.mrb[0].mxu0 %v264
        %v554 = vpop.f32.mrb[0].mxu0
        %v555 = vadd.f32 0.0, %v554
        %v556 = vpop.f32.mrb[0].mxu0
        %v557 = vadd.f32 0.0, %v556
        %v558 = vpop.f32.mrb[0].mxu0
        %v559 = vadd.f32 0.0, %v558
        %v560 = vpop.f32.mrb[0].mxu0
        %v561 = vadd.f32 0.0, %v560
        %562 = vmatprep.mubr.bf16.mxu0 %v267
        %563 = vmatmul.mubr.bf16.gmra.mrb[0].mxu0 %v266
        %v564 = vpop.f32.mrb[0].mxu0
        %v565 = vadd.f32 0.0, %v564
        %v566 = vpop.f32.mrb[0].mxu0
        %v567 = vadd.f32 0.0, %v566
        %v568 = vpop.f32.mrb[0].mxu0
        %v569 = vadd.f32 0.0, %v568
        %v570 = vpop.f32.mrb[0].mxu0
        %v571 = vadd.f32 0.0, %v570
        %572 = vmatprep.mubr.bf16.mxu0 %v269
        %573 = vmatmul.mubr.bf16.gmra.mrb[0].mxu0 %v268
        %v574 = vpop.f32.mrb[0].mxu0
        %v575 = vadd.f32 0.0, %v574
        %v576 = vpop.f32.mrb[0].mxu0
        %v577 = vadd.f32 0.0, %v576
        %v578 = vpop.f32.mrb[0].mxu0
        %v579 = vadd.f32 0.0, %v578
        %v580 = vpop.f32.mrb[0].mxu0
        %v581 = vadd.f32 0.0, %v580
        %582 = vmatprep.mubr.bf16.mxu0 %v271
        %583 = vmatmul.mubr.bf16.gmra.mrb[0].mxu0 %v270
        %v584 = vpop.f32.mrb[0].mxu0
        %v585 = vadd.f32 0.0, %v584
        %v586 = vpop.f32.mrb[0].mxu0
        %v587 = vadd.f32 0.0, %v586
        %v588 = vpop.f32.mrb[0].mxu0
        %v589 = vadd.f32 0.0, %v588
        %v590 = vpop.f32.mrb[0].mxu0
        %v591 = vadd.f32 0.0, %v590
        %592 = vmatprep.mubr.bf16.mxu0 %v273
        %593 = vmatmul.mubr.bf16.gmra.mrb[0].mxu0 %v272
        %v594 = vpop.f32.mrb[0].mxu0
        %v595 = vadd.f32 0.0, %v594
        %v596 = vpop.f32.mrb[0].mxu0
        %v597 = vadd.f32 0.0, %v596
        %v598 = vpop.f32.mrb[0].mxu0
        %v599 = vadd.f32 0.0, %v598
        %v600 = vpop.f32.mrb[0].mxu0
        %v601 = vadd.f32 0.0, %v600
        %602 = vmatprep.mubr.bf16.mxu0 %v275
        %603 = vmatmul.mubr.bf16.gmra.mrb[0].mxu0 %v274
        %v604 = vpop.f32.mrb[0].mxu0
        %v605 = vadd.f32 0.0, %v604
        %v606 = vpop.f32.mrb[0].mxu0
        %v607 = vadd.f32 0.0, %v606
        %v608 = vpop.f32.mrb[0].mxu0
        %v609 = vadd.f32 0.0, %v608
        %v610 = vpop.f32.mrb[0].mxu0
        %v611 = vadd.f32 0.0, %v610
        %612 = vdwg.mxu0
        %v613 = vmul.f32 %v455, 0.125
        %v614 = vmul.f32 %v459, 0.125
        %v615 = vmul.f32 %v465, 0.125
        %v616 = vmul.f32 %v469, 0.125
        %v617 = vmul.f32 %v475, 0.125
        %v618 = vmul.f32 %v479, 0.125
        %v619 = vmul.f32 %v485, 0.125
        %v620 = vmul.f32 %v489, 0.125
        %v621 = vmul.f32 %v495, 0.125
        %v622 = vmul.f32 %v499, 0.125
        %v623 = vmul.f32 %v505, 0.125
        %v624 = vmul.f32 %v509, 0.125
        %v625 = vmul.f32 %v515, 0.125
        %v626 = vmul.f32 %v519, 0.125
        %v627 = vmul.f32 %v525, 0.125
        %v628 = vmul.f32 %v529, 0.125
        %v629 = vmul.f32 %v535, 0.125
        %v630 = vmul.f32 %v539, 0.125
        %v631 = vmul.f32 %v545, 0.125
        %v632 = vmul.f32 %v549, 0.125
        %v633 = vmul.f32 %v555, 0.125
        %v634 = vmul.f32 %v559, 0.125
        %v635 = vmul.f32 %v565, 0.125
        %v636 = vmul.f32 %v569, 0.125
        %v637 = vmul.f32 %v575, 0.125
        %v638 = vmul.f32 %v579, 0.125
        %v639 = vmul.f32 %v585, 0.125
        %v640 = vmul.f32 %v589, 0.125
        %v641 = vmul.f32 %v595, 0.125
        %v642 = vmul.f32 %v599, 0.125
        %v643 = vmul.f32 %v605, 0.125
        %v644 = vmul.f32 %v609, 0.125
        %v645 = vpack.c.bf16 %v614, %v613
        %v646 = vpack.c.bf16 %v616, %v615
        %v647 = vpack.c.bf16 %v618, %v617
        %v648 = vpack.c.bf16 %v620, %v619
        %v649 = vpack.c.bf16 %v622, %v621
        %v650 = vpack.c.bf16 %v624, %v623
        %v651 = vpack.c.bf16 %v626, %v625
        %v652 = vpack.c.bf16 %v628, %v627
        %v653 = vpack.c.bf16 %v630, %v629
        %v654 = vpack.c.bf16 %v632, %v631
        %v655 = vpack.c.bf16 %v634, %v633
        %v656 = vpack.c.bf16 %v636, %v635
        %v657 = vpack.c.bf16 %v638, %v637
        %v658 = vpack.c.bf16 %v640, %v639
        %v659 = vpack.c.bf16 %v642, %v641
        %v660 = vpack.c.bf16 %v644, %v643
        %v661 = vpack.c.bf16 %v459, %v455
        %v662 = vpack.c.bf16 %v469, %v465
        %v663 = vpack.c.bf16 %v479, %v475
        %v664 = vpack.c.bf16 %v489, %v485
        %v665 = vpack.c.bf16 %v499, %v495
        %v666 = vpack.c.bf16 %v509, %v505
        %v667 = vpack.c.bf16 %v519, %v515
        %v668 = vpack.c.bf16 %v529, %v525
        %v669 = vpack.c.bf16 %v539, %v535
        %v670 = vpack.c.bf16 %v549, %v545
        %v671 = vpack.c.bf16 %v559, %v555
        %v672 = vpack.c.bf16 %v569, %v565
        %v673 = vpack.c.bf16 %v579, %v575
        %v674 = vpack.c.bf16 %v589, %v585
        %v675 = vpack.c.bf16 %v599, %v595
        %v676 = vpack.c.bf16 %v609, %v605
        %v677 = vpack.c.bf16 %v461, %v457
        %v678 = vpack.c.bf16 %v471, %v467
        %v679 = vpack.c.bf16 %v481, %v477
        %v680 = vpack.c.bf16 %v491, %v487
        %v681 = vpack.c.bf16 %v501, %v497
        %v682 = vpack.c.bf16 %v511, %v507
        %v683 = vpack.c.bf16 %v521, %v517
        %v684 = vpack.c.bf16 %v531, %v527
        %v685 = vpack.c.bf16 %v541, %v537
        %v686 = vpack.c.bf16 %v551, %v547
        %v687 = vpack.c.bf16 %v561, %v557
        %v688 = vpack.c.bf16 %v571, %v567
        %v689 = vpack.c.bf16 %v581, %v577
        %v690 = vpack.c.bf16 %v591, %v587
        %v691 = vpack.c.bf16 %v601, %v597
        %v692 = vpack.c.bf16 %v611, %v607
        %v693 = vlaneseq
        %v694 = vshrl.u32 %v693, 7
        %v695 = vadd.s32 %v694, 8
        %v696 = vadd.s32 %v694, 16
        %v697 = vadd.s32 %v694, 24
        %v698 = vadd.s32 %v694, 32
        %v699 = vadd.s32 %v694, 40
        %v700 = vadd.s32 %v694, 48
        %v701 = vadd.s32 %v694, 56
        %v702 = vadd.s32 %v694, 64
        %v703 = vadd.s32 %v694, 72
        %v704 = vadd.s32 %v694, 80
        %v705 = vadd.s32 %v694, 88
        %v706 = vadd.s32 %v694, 96
        %v707 = vadd.s32 %v694, 104
        %v708 = vadd.s32 %v694, 112
        %v709 = vadd.s32 %v694, 120
        %v710 = vlaneseq
        %v711 = vand.u32 %v710, 127
        %vm712 = vcmp.le.s32.totalorder %v711, %v694
        %vm713 = vcmp.le.s32.totalorder %v711, %v695
        %vm714 = vcmp.le.s32.totalorder %v711, %v696
        %vm715 = vcmp.le.s32.totalorder %v711, %v697
        %vm716 = vcmp.le.s32.totalorder %v711, %v698
        %vm717 = vcmp.le.s32.totalorder %v711, %v699
        %vm718 = vcmp.le.s32.totalorder %v711, %v700
        %vm719 = vcmp.le.s32.totalorder %v711, %v701
        %vm720 = vcmp.le.s32.totalorder %v711, %v702
        %vm721 = vcmp.le.s32.totalorder %v711, %v703
        %vm722 = vcmp.le.s32.totalorder %v711, %v704
        %vm723 = vcmp.le.s32.totalorder %v711, %v705
        %vm724 = vcmp.le.s32.totalorder %v711, %v706
        %vm725 = vcmp.le.s32.totalorder %v711, %v707
        %vm726 = vcmp.le.s32.totalorder %v711, %v708
        %vm727 = vcmp.le.s32.totalorder %v711, %v709
        %736 = vrot.lane.b32.xlu0 %v661, 64
        %v737 = vpop.permute.xlu0 %736
        %738 = vrot.lane.b32.xlu0 %v662, 64
        %v739 = vpop.permute.xlu0 %738
        %740 = vrot.lane.b32.xlu0 %v663, 64
        %v741 = vpop.permute.xlu0 %740
        %742 = vrot.lane.b32.xlu0 %v664, 64
        %v743 = vpop.permute.xlu0 %742
        %744 = vrot.lane.b32.xlu0 %v665, 64
        %v745 = vpop.permute.xlu0 %744
        %746 = vrot.lane.b32.xlu0 %v666, 64
        %v747 = vpop.permute.xlu0 %746
        %748 = vrot.lane.b32.xlu0 %v667, 64
        %v749 = vpop.permute.xlu0 %748
        %750 = vrot.lane.b32.xlu0 %v668, 64
        %v751 = vpop.permute.xlu0 %750
        %vm752 = vcmask 523264
        %v754 = vsel %vm752, %v645, 0
        %v757 = vsel %vm752, %v646, 0
        %v760 = vsel %vm752, %v647, 0
        %v763 = vsel %vm752, %v648, 0
        %v766 = vsel %vm752, %v649, 0
        %v769 = vsel %vm752, %v650, 0
        %v772 = vsel %vm752, %v651, 0
        %v775 = vsel %vm752, %v652, 0
        %v778 = vsel %vm752, %v737, 0
        %v781 = vsel %vm752, %v739, 0
        %v784 = vsel %vm752, %v741, 0
        %v787 = vsel %vm752, %v743, 0
        %v790 = vsel %vm752, %v745, 0
        %v793 = vsel %vm752, %v747, 0
        %v796 = vsel %vm752, %v749, 0
        %v799 = vsel %vm752, %v751, 0
        %801 = vmatprep.subr.bf16.mxu0 0
        %802 = vmatpush1.bf16.xpose.msra.mxu0 %v778
        %803 = vmatprep.subr.bf16.mxu0 0
        %804 = vmatpush1.bf16.xpose.msra.mxu0 %v781
        %805 = vmatprep.subr.bf16.mxu0 0
        %806 = vmatpush1.bf16.xpose.msra.mxu0 %v784
        %807 = vmatprep.subr.bf16.mxu0 0
        %808 = vmatpush1.bf16.xpose.msra.mxu0 %v787
        %809 = vmatprep.subr.bf16.mxu0 0
        %810 = vmatpush1.bf16.xpose.msra.mxu0 %v790
        %811 = vmatprep.subr.bf16.mxu0 0
        %812 = vmatpush1.bf16.xpose.msra.mxu0 %v793
        %813 = vmatprep.subr.bf16.mxu0 0
        %814 = vmatpush1.bf16.xpose.msra.mxu0 %v796
        %815 = vmatprep.subr.bf16.mxu0 0
        %816 = vmatpush1.bf16.xpose.msra.mxu0 %v799
        %817 = vmatprep.subr.bf16.mxu0 0
        %818 = vmatpush1.bf16.xpose.msra.mxu0 0
        %819 = vmatprep.subr.bf16.mxu0 0
        %820 = vmatpush1.bf16.xpose.msra.mxu0 0
        %821 = vmatprep.subr.bf16.mxu0 0
        %822 = vmatpush1.bf16.xpose.msra.mxu0 0
        %823 = vmatprep.subr.bf16.mxu0 0
        %824 = vmatpush1.bf16.xpose.msra.mxu0 0
        %825 = vmatprep.subr.bf16.mxu0 0
        %826 = vmatpush1.bf16.xpose.msra.mxu0 0
        %827 = vmatprep.subr.bf16.mxu0 0
        %828 = vmatpush1.bf16.xpose.msra.mxu0 0
        %829 = vmatprep.subr.bf16.mxu0 0
        %830 = vmatpush1.bf16.xpose.msra.mxu0 0
        %831 = vmatprep.subr.bf16.mxu0 0
        %832 = vmatpush1.bf16.xpose.msra.mxu0 0
        %833 = vmatprep.mubr.bf16.mxu0 0
        %834 = vmatmul.mubr.bf16.gmra.mrb[0].mxu0 %v754
        %v835 = vpop.f32.mrb[0].mxu0
        %v836 = vadd.f32 0.0, %v835
        %v837 = vpop.f32.mrb[0].mxu0
        %v838 = vpop.f32.mrb[0].mxu0
        %v839 = vadd.f32 0.0, %v838
        %v840 = vpop.f32.mrb[0].mxu0
        %841 = vmatprep.mubr.bf16.mxu0 0
        %842 = vmatmul.mubr.bf16.gmra.mrb[0].mxu0 %v757
        %v843 = vpop.f32.mrb[0].mxu0
        %v844 = vadd.f32 0.0, %v843
        %v845 = vpop.f32.mrb[0].mxu0
        %v846 = vpop.f32.mrb[0].mxu0
        %v847 = vadd.f32 0.0, %v846
        %v848 = vpop.f32.mrb[0].mxu0
        %849 = vmatprep.mubr.bf16.mxu0 0
        %850 = vmatmul.mubr.bf16.gmra.mrb[0].mxu0 %v760
        %v851 = vpop.f32.mrb[0].mxu0
        %v852 = vadd.f32 0.0, %v851
        %v853 = vpop.f32.mrb[0].mxu0
        %v854 = vpop.f32.mrb[0].mxu0
        %v855 = vadd.f32 0.0, %v854
        %v856 = vpop.f32.mrb[0].mxu0
        %857 = vmatprep.mubr.bf16.mxu0 0
        %858 = vmatmul.mubr.bf16.gmra.mrb[0].mxu0 %v763
        %v859 = vpop.f32.mrb[0].mxu0
        %v860 = vadd.f32 0.0, %v859
        %v861 = vpop.f32.mrb[0].mxu0
        %v862 = vpop.f32.mrb[0].mxu0
        %v863 = vadd.f32 0.0, %v862
        %v864 = vpop.f32.mrb[0].mxu0
        %865 = vmatprep.mubr.bf16.mxu0 0
        %866 = vmatmul.mubr.bf16.gmra.mrb[0].mxu0 %v766
        %v867 = vpop.f32.mrb[0].mxu0
        %v868 = vadd.f32 0.0, %v867
        %v869 = vpop.f32.mrb[0].mxu0
        %v870 = vpop.f32.mrb[0].mxu0
        %v871 = vadd.f32 0.0, %v870
        %v872 = vpop.f32.mrb[0].mxu0
        %873 = vmatprep.mubr.bf16.mxu0 0
        %874 = vmatmul.mubr.bf16.gmra.mrb[0].mxu0 %v769
        %v875 = vpop.f32.mrb[0].mxu0
        %v876 = vadd.f32 0.0, %v875
        %v877 = vpop.f32.mrb[0].mxu0
        %v878 = vpop.f32.mrb[0].mxu0
        %v879 = vadd.f32 0.0, %v878
        %v880 = vpop.f32.mrb[0].mxu0
        %881 = vmatprep.mubr.bf16.mxu0 0
        %882 = vmatmul.mubr.bf16.gmra.mrb[0].mxu0 %v772
        %v883 = vpop.f32.mrb[0].mxu0
        %v884 = vadd.f32 0.0, %v883
        %v885 = vpop.f32.mrb[0].mxu0
        %v886 = vpop.f32.mrb[0].mxu0
        %v887 = vadd.f32 0.0, %v886
        %v888 = vpop.f32.mrb[0].mxu0
        %889 = vmatprep.mubr.bf16.mxu0 0
        %890 = vmatmul.mubr.bf16.gmra.mrb[0].mxu0 %v775
        %v891 = vpop.f32.mrb[0].mxu0
        %v892 = vadd.f32 0.0, %v891
        %v893 = vpop.f32.mrb[0].mxu0
        %v894 = vpop.f32.mrb[0].mxu0
        %v895 = vadd.f32 0.0, %v894
        %v896 = vpop.f32.mrb[0].mxu0
        %897 = vdwg.mxu0
        %v898 = vsel %vm712, %v836, -inf
        %v899 = vsel %vm713, %v839, -inf
        %v900 = vsel %vm714, %v844, -inf
        %v901 = vsel %vm715, %v847, -inf
        %v902 = vsel %vm716, %v852, -inf
        %v903 = vsel %vm717, %v855, -inf
        %v904 = vsel %vm718, %v860, -inf
        %v905 = vsel %vm719, %v863, -inf
        %v906 = vsel %vm720, %v868, -inf
        %v907 = vsel %vm721, %v871, -inf
        %v908 = vsel %vm722, %v876, -inf
        %v909 = vsel %vm723, %v879, -inf
        %v910 = vsel %vm724, %v884, -inf
        %v911 = vsel %vm725, %v887, -inf
        %v912 = vsel %vm726, %v892, -inf
        %v913 = vsel %vm727, %v895, -inf
        %914 = vmax.xlane.f32.xlu0 %v898
        %v915 = vpop.xlane.xlu0 %914
        %916 = vmax.xlane.f32.xlu0 %v899
        %v917 = vpop.xlane.xlu0 %916
        %918 = vmax.xlane.f32.xlu0 %v900
        %v919 = vpop.xlane.xlu0 %918
        %920 = vmax.xlane.f32.xlu0 %v901
        %v921 = vpop.xlane.xlu0 %920
        %922 = vmax.xlane.f32.xlu0 %v902
        %v923 = vpop.xlane.xlu0 %922
        %924 = vmax.xlane.f32.xlu0 %v903
        %v925 = vpop.xlane.xlu0 %924
        %926 = vmax.xlane.f32.xlu0 %v904
        %v927 = vpop.xlane.xlu0 %926
        %928 = vmax.xlane.f32.xlu0 %v905
        %v929 = vpop.xlane.xlu0 %928
        %930 = vmax.xlane.f32.xlu0 %v906
        %v931 = vpop.xlane.xlu0 %930
        %932 = vmax.xlane.f32.xlu0 %v907
        %v933 = vpop.xlane.xlu0 %932
        %934 = vmax.xlane.f32.xlu0 %v908
        %v935 = vpop.xlane.xlu0 %934
        %936 = vmax.xlane.f32.xlu0 %v909
        %v937 = vpop.xlane.xlu0 %936
        %938 = vmax.xlane.f32.xlu0 %v910
        %v939 = vpop.xlane.xlu0 %938
        %940 = vmax.xlane.f32.xlu0 %v911
        %v941 = vpop.xlane.xlu0 %940
        %942 = vmax.xlane.f32.xlu0 %v912
        %v943 = vpop.xlane.xlu0 %942
        %944 = vmax.xlane.f32.xlu0 %v913
        %v945 = vpop.xlane.xlu0 %944
        %v946 = vsub.f32 %v898, %v915
        %v947 = vsub.f32 %v899, %v917
        %v948 = vsub.f32 %v900, %v919
        %v949 = vsub.f32 %v901, %v921
        %v950 = vsub.f32 %v902, %v923
        %v951 = vsub.f32 %v903, %v925
        %v952 = vsub.f32 %v904, %v927
        %v953 = vsub.f32 %v905, %v929
        %v954 = vsub.f32 %v906, %v931
        %v955 = vsub.f32 %v907, %v933
        %v956 = vsub.f32 %v908, %v935
        %v957 = vsub.f32 %v909, %v937
        %v958 = vsub.f32 %v910, %v939
        %v959 = vsub.f32 %v911, %v941
        %v960 = vsub.f32 %v912, %v943
        %v961 = vsub.f32 %v913, %v945
        %v962 = vmul.f32 %v946, 1.442695
        %v963 = vpow.pop %v962
        %v964 = vmul.f32 %v947, 1.442695
        %v965 = vpow.pop %v964
        %v966 = vmul.f32 %v948, 1.442695
        %v967 = vpow.pop %v966
        %v968 = vmul.f32 %v949, 1.442695
        %v969 = vpow.pop %v968
        %v970 = vmul.f32 %v950, 1.442695
        %v971 = vpow.pop %v970
        %v972 = vmul.f32 %v951, 1.442695
        %v973 = vpow.pop %v972
        %v974 = vmul.f32 %v952, 1.442695
        %v975 = vpow.pop %v974
        %v976 = vmul.f32 %v953, 1.442695
        %v977 = vpow.pop %v976
        %v978 = vmul.f32 %v954, 1.442695
        %v979 = vpow.pop %v978
        %v980 = vmul.f32 %v955, 1.442695
        %v981 = vpow.pop %v980
        %v982 = vmul.f32 %v956, 1.442695
        %v983 = vpow.pop %v982
        %v984 = vmul.f32 %v957, 1.442695
        %v985 = vpow.pop %v984
        %v986 = vmul.f32 %v958, 1.442695
        %v987 = vpow.pop %v986
        %v988 = vmul.f32 %v959, 1.442695
        %v989 = vpow.pop %v988
        %v990 = vmul.f32 %v960, 1.442695
        %v991 = vpow.pop %v990
        %v992 = vmul.f32 %v961, 1.442695
        %v993 = vpow.pop %v992
        %994 = vadd.xlane.f32.xlu0 %v963
        %v995 = vpop.xlane.xlu0 %994
        %996 = vadd.xlane.f32.xlu0 %v965
        %v997 = vpop.xlane.xlu0 %996
        %998 = vadd.xlane.f32.xlu0 %v967
        %v999 = vpop.xlane.xlu0 %998
        %1000 = vadd.xlane.f32.xlu0 %v969
        %v1001 = vpop.xlane.xlu0 %1000
        %1002 = vadd.xlane.f32.xlu0 %v971
        %v1003 = vpop.xlane.xlu0 %1002
        %1004 = vadd.xlane.f32.xlu0 %v973
        %v1005 = vpop.xlane.xlu0 %1004
        %1006 = vadd.xlane.f32.xlu0 %v975
        %v1007 = vpop.xlane.xlu0 %1006
        %1008 = vadd.xlane.f32.xlu0 %v977
        %v1009 = vpop.xlane.xlu0 %1008
        %1010 = vadd.xlane.f32.xlu0 %v979
        %v1011 = vpop.xlane.xlu0 %1010
        %1012 = vadd.xlane.f32.xlu0 %v981
        %v1013 = vpop.xlane.xlu0 %1012
        %1014 = vadd.xlane.f32.xlu0 %v983
        %v1015 = vpop.xlane.xlu0 %1014
        %1016 = vadd.xlane.f32.xlu0 %v985
        %v1017 = vpop.xlane.xlu0 %1016
        %1018 = vadd.xlane.f32.xlu0 %v987
        %v1019 = vpop.xlane.xlu0 %1018
        %1020 = vadd.xlane.f32.xlu0 %v989
        %v1021 = vpop.xlane.xlu0 %1020
        %1022 = vadd.xlane.f32.xlu0 %v991
        %v1023 = vpop.xlane.xlu0 %1022
        %1024 = vadd.xlane.f32.xlu0 %v993
        %v1025 = vpop.xlane.xlu0 %1024
        %v1026 = vpack.c.bf16 %v965, %v963
        %v1027 = vpack.c.bf16 %v969, %v967
        %v1028 = vpack.c.bf16 %v973, %v971
        %v1029 = vpack.c.bf16 %v977, %v975
        %v1030 = vpack.c.bf16 %v981, %v979
        %v1031 = vpack.c.bf16 %v985, %v983
        %v1032 = vpack.c.bf16 %v989, %v987
        %v1033 = vpack.c.bf16 %v993, %v991
        %1034 = vmatprep.subr.bf16.mxu0 0
        %1035 = vmatpush1.bf16.msra.mxu0 %v677
        %1036 = vmatprep.subr.bf16.mxu0 0
        %1037 = vmatpush1.bf16.msra.mxu0 %v678
        %1038 = vmatprep.subr.bf16.mxu0 0
        %1039 = vmatpush1.bf16.msra.mxu0 %v679
        %1040 = vmatprep.subr.bf16.mxu0 0
        %1041 = vmatpush1.bf16.msra.mxu0 %v680
        %1042 = vmatprep.subr.bf16.mxu0 0
        %1043 = vmatpush1.bf16.msra.mxu0 %v681
        %1044 = vmatprep.subr.bf16.mxu0 0
        %1045 = vmatpush1.bf16.msra.mxu0 %v682
        %1046 = vmatprep.subr.bf16.mxu0 0
        %1047 = vmatpush1.bf16.msra.mxu0 %v683
        %1048 = vmatprep.subr.bf16.mxu0 0
        %1049 = vmatpush1.bf16.msra.mxu0 %v684
        %1050 = vmatprep.subr.bf16.mxu0 0
        %1051 = vmatpush1.bf16.msra.mxu0 0
        %1052 = vmatprep.subr.bf16.mxu0 0
        %1053 = vmatpush1.bf16.msra.mxu0 0
        %1054 = vmatprep.subr.bf16.mxu0 0
        %1055 = vmatpush1.bf16.msra.mxu0 0
        %1056 = vmatprep.subr.bf16.mxu0 0
        %1057 = vmatpush1.bf16.msra.mxu0 0
        %1058 = vmatprep.subr.bf16.mxu0 0
        %1059 = vmatpush1.bf16.msra.mxu0 0
        %1060 = vmatprep.subr.bf16.mxu0 0
        %1061 = vmatpush1.bf16.msra.mxu0 0
        %1062 = vmatprep.subr.bf16.mxu0 0
        %1063 = vmatpush1.bf16.msra.mxu0 0
        %1064 = vmatprep.subr.bf16.mxu0 0
        %1065 = vmatpush1.bf16.msra.mxu0 0
        %1066 = vmatprep.mubr.bf16.mxu0 0
        %1067 = vmatmul.mubr.bf16.gmra.mrb[0].mxu0 %v1026
        %v1068 = vpop.f32.mrb[0].mxu0
        %v1069 = vadd.f32 0.0, %v1068
        %v1070 = vpop.f32.mrb[0].mxu0
        %v1071 = vpop.f32.mrb[0].mxu0
        %v1072 = vadd.f32 0.0, %v1071
        %v1073 = vpop.f32.mrb[0].mxu0
        %1074 = vmatprep.mubr.bf16.mxu0 0
        %1075 = vmatmul.mubr.bf16.gmra.mrb[0].mxu0 %v1027
        %v1076 = vpop.f32.mrb[0].mxu0
        %v1077 = vadd.f32 0.0, %v1076
        %v1078 = vpop.f32.mrb[0].mxu0
        %v1079 = vpop.f32.mrb[0].mxu0
        %v1080 = vadd.f32 0.0, %v1079
        %v1081 = vpop.f32.mrb[0].mxu0
        %1082 = vmatprep.mubr.bf16.mxu0 0
        %1083 = vmatmul.mubr.bf16.gmra.mrb[0].mxu0 %v1028
        %v1084 = vpop.f32.mrb[0].mxu0
        %v1085 = vadd.f32 0.0, %v1084
        %v1086 = vpop.f32.mrb[0].mxu0
        %v1087 = vpop.f32.mrb[0].mxu0
        %v1088 = vadd.f32 0.0, %v1087
        %v1089 = vpop.f32.mrb[0].mxu0
        %1090 = vmatprep.mubr.bf16.mxu0 0
        %1091 = vmatmul.mubr.bf16.gmra.mrb[0].mxu0 %v1029
        %v1092 = vpop.f32.mrb[0].mxu0
        %v1093 = vadd.f32 0.0, %v1092
        %v1094 = vpop.f32.mrb[0].mxu0
        %v1095 = vpop.f32.mrb[0].mxu0
        %v1096 = vadd.f32 0.0, %v1095
        %v1097 = vpop.f32.mrb[0].mxu0
        %1098 = vmatprep.mubr.bf16.mxu0 0
        %1099 = vmatmul.mubr.bf16.gmra.mrb[0].mxu0 %v1030
        %v1100 = vpop.f32.mrb[0].mxu0
        %v1101 = vadd.f32 0.0, %v1100
        %v1102 = vpop.f32.mrb[0].mxu0
        %v1103 = vpop.f32.mrb[0].mxu0
        %v1104 = vadd.f32 0.0, %v1103
        %v1105 = vpop.f32.mrb[0].mxu0
        %1106 = vmatprep.mubr.bf16.mxu0 0
        %1107 = vmatmul.mubr.bf16.gmra.mrb[0].mxu0 %v1031
        %v1108 = vpop.f32.mrb[0].mxu0
        %v1109 = vadd.f32 0.0, %v1108
        %v1110 = vpop.f32.mrb[0].mxu0
        %v1111 = vpop.f32.mrb[0].mxu0
        %v1112 = vadd.f32 0.0, %v1111
        %v1113 = vpop.f32.mrb[0].mxu0
        %1114 = vmatprep.mubr.bf16.mxu0 0
        %1115 = vmatmul.mubr.bf16.gmra.mrb[0].mxu0 %v1032
        %v1116 = vpop.f32.mrb[0].mxu0
        %v1117 = vadd.f32 0.0, %v1116
        %v1118 = vpop.f32.mrb[0].mxu0
        %v1119 = vpop.f32.mrb[0].mxu0
        %v1120 = vadd.f32 0.0, %v1119
        %v1121 = vpop.f32.mrb[0].mxu0
        %1122 = vmatprep.mubr.bf16.mxu0 0
        %1123 = vmatmul.mubr.bf16.gmra.mrb[0].mxu0 %v1033
        %v1124 = vpop.f32.mrb[0].mxu0
        %v1125 = vadd.f32 0.0, %v1124
        %v1126 = vpop.f32.mrb[0].mxu0
        %v1127 = vpop.f32.mrb[0].mxu0
        %v1128 = vadd.f32 0.0, %v1127
        %v1129 = vpop.f32.mrb[0].mxu0
        %1130 = vdwg.mxu0
        %v1131 = vrcp.pop %v995
        %v1132 = vrcp.pop %v997
        %v1133 = vrcp.pop %v999
        %v1134 = vrcp.pop %v1001
        %v1135 = vrcp.pop %v1003
        %v1136 = vrcp.pop %v1005
        %v1137 = vrcp.pop %v1007
        %v1138 = vrcp.pop %v1009
        %v1139 = vrcp.pop %v1011
        %v1140 = vrcp.pop %v1013
        %v1141 = vrcp.pop %v1015
        %v1142 = vrcp.pop %v1017
        %v1143 = vrcp.pop %v1019
        %v1144 = vrcp.pop %v1021
        %v1145 = vrcp.pop %v1023
        %v1146 = vrcp.pop %v1025
        %v1147 = vmul.f32 %v1069, %v1131
        %v1148 = vmul.f32 %v1072, %v1132
        %v1149 = vmul.f32 %v1077, %v1133
        %v1150 = vmul.f32 %v1080, %v1134
        %v1151 = vmul.f32 %v1085, %v1135
        %v1152 = vmul.f32 %v1088, %v1136
        %v1153 = vmul.f32 %v1093, %v1137
        %v1154 = vmul.f32 %v1096, %v1138
        %v1155 = vmul.f32 %v1101, %v1139
        %v1156 = vmul.f32 %v1104, %v1140
        %v1157 = vmul.f32 %v1109, %v1141
        %v1158 = vmul.f32 %v1112, %v1142
        %v1159 = vmul.f32 %v1117, %v1143
        %v1160 = vmul.f32 %v1120, %v1144
        %v1161 = vmul.f32 %v1125, %v1145
        %v1162 = vmul.f32 %v1128, %v1146
        %1163 = vst.msk [vmem:[%s178] sm:$0xff] %vm752, %v1147
        %1164 = vst.msk [vmem:[%s178 + $0x8] sm:$0xff] %vm752, %v1148
        %1165 = vst.msk [vmem:[%s178 + $0x10] sm:$0xff] %vm752, %v1149
        %1166 = vst.msk [vmem:[%s178 + $0x18] sm:$0xff] %vm752, %v1150
        %1167 = vst.msk [vmem:[%s178 + $0x20] sm:$0xff] %vm752, %v1151
        %1168 = vst.msk [vmem:[%s178 + $0x28] sm:$0xff] %vm752, %v1152
        %1169 = vst.msk [vmem:[%s178 + $0x30] sm:$0xff] %vm752, %v1153
        %1170 = vst.msk [vmem:[%s178 + $0x38] sm:$0xff] %vm752, %v1154
        %1171 = vst.msk [vmem:[%s178 + $0x40] sm:$0xff] %vm752, %v1155
        %1172 = vst.msk [vmem:[%s178 + $0x48] sm:$0xff] %vm752, %v1156
        %1173 = vst.msk [vmem:[%s178 + $0x50] sm:$0xff] %vm752, %v1157
        %1174 = vst.msk [vmem:[%s178 + $0x58] sm:$0xff] %vm752, %v1158
        %1175 = vst.msk [vmem:[%s178 + $0x60] sm:$0xff] %vm752, %v1159
        %1176 = vst.msk [vmem:[%s178 + $0x68] sm:$0xff] %vm752, %v1160
        %1177 = vst.msk [vmem:[%s178 + $0x70] sm:$0xff] %vm752, %v1161
        %1178 = vst.msk [vmem:[%s178 + $0x78] sm:$0xff] %vm752, %v1162
        %v1180 = vsel %vm752, %v653, 0
        %v1183 = vsel %vm752, %v654, 0
        %v1186 = vsel %vm752, %v655, 0
        %v1189 = vsel %vm752, %v656, 0
        %v1192 = vsel %vm752, %v657, 0
        %v1195 = vsel %vm752, %v658, 0
        %v1198 = vsel %vm752, %v659, 0
        %v1201 = vsel %vm752, %v660, 0
        %1203 = vmatprep.subr.bf16.mxu0 0
        %1204 = vmatpush1.bf16.xpose.msra.mxu0 %v778
        %1205 = vmatprep.subr.bf16.mxu0 0
        %1206 = vmatpush1.bf16.xpose.msra.mxu0 %v781
        %1207 = vmatprep.subr.bf16.mxu0 0
        %1208 = vmatpush1.bf16.xpose.msra.mxu0 %v784
        %1209 = vmatprep.subr.bf16.mxu0 0
        %1210 = vmatpush1.bf16.xpose.msra.mxu0 %v787
        %1211 = vmatprep.subr.bf16.mxu0 0
        %1212 = vmatpush1.bf16.xpose.msra.mxu0 %v790
        %1213 = vmatprep.subr.bf16.mxu0 0
        %1214 = vmatpush1.bf16.xpose.msra.mxu0 %v793
        %1215 = vmatprep.subr.bf16.mxu0 0
        %1216 = vmatpush1.bf16.xpose.msra.mxu0 %v796
        %1217 = vmatprep.subr.bf16.mxu0 0
        %1218 = vmatpush1.bf16.xpose.msra.mxu0 %v799
        %1219 = vmatprep.subr.bf16.mxu0 0
        %1220 = vmatpush1.bf16.xpose.msra.mxu0 0
        %1221 = vmatprep.subr.bf16.mxu0 0
        %1222 = vmatpush1.bf16.xpose.msra.mxu0 0
        %1223 = vmatprep.subr.bf16.mxu0 0
        %1224 = vmatpush1.bf16.xpose.msra.mxu0 0
        %1225 = vmatprep.subr.bf16.mxu0 0
        %1226 = vmatpush1.bf16.xpose.msra.mxu0 0
        %1227 = vmatprep.subr.bf16.mxu0 0
        %1228 = vmatpush1.bf16.xpose.msra.mxu0 0
        %1229 = vmatprep.subr.bf16.mxu0 0
        %1230 = vmatpush1.bf16.xpose.msra.mxu0 0
        %1231 = vmatprep.subr.bf16.mxu0 0
        %1232 = vmatpush1.bf16.xpose.msra.mxu0 0
        %1233 = vmatprep.subr.bf16.mxu0 0
        %1234 = vmatpush1.bf16.xpose.msra.mxu0 0
        %1235 = vmatprep.mubr.bf16.mxu0 0
        %1236 = vmatmul.mubr.bf16.gmra.mrb[0].mxu0 %v1180
        %v1237 = vpop.f32.mrb[0].mxu0
        %v1238 = vadd.f32 0.0, %v1237
        %v1239 = vpop.f32.mrb[0].mxu0
        %v1240 = vpop.f32.mrb[0].mxu0
        %v1241 = vadd.f32 0.0, %v1240
        %v1242 = vpop.f32.mrb[0].mxu0
        %1243 = vmatprep.mubr.bf16.mxu0 0
        %1244 = vmatmul.mubr.bf16.gmra.mrb[0].mxu0 %v1183
        %v1245 = vpop.f32.mrb[0].mxu0
        %v1246 = vadd.f32 0.0, %v1245
        %v1247 = vpop.f32.mrb[0].mxu0
        %v1248 = vpop.f32.mrb[0].mxu0
        %v1249 = vadd.f32 0.0, %v1248
        %v1250 = vpop.f32.mrb[0].mxu0
        %1251 = vmatprep.mubr.bf16.mxu0 0
        %1252 = vmatmul.mubr.bf16.gmra.mrb[0].mxu0 %v1186
        %v1253 = vpop.f32.mrb[0].mxu0
        %v1254 = vadd.f32 0.0, %v1253
        %v1255 = vpop.f32.mrb[0].mxu0
        %v1256 = vpop.f32.mrb[0].mxu0
        %v1257 = vadd.f32 0.0, %v1256
        %v1258 = vpop.f32.mrb[0].mxu0
        %1259 = vmatprep.mubr.bf16.mxu0 0
        %1260 = vmatmul.mubr.bf16.gmra.mrb[0].mxu0 %v1189
        %v1261 = vpop.f32.mrb[0].mxu0
        %v1262 = vadd.f32 0.0, %v1261
        %v1263 = vpop.f32.mrb[0].mxu0
        %v1264 = vpop.f32.mrb[0].mxu0
        %v1265 = vadd.f32 0.0, %v1264
        %v1266 = vpop.f32.mrb[0].mxu0
        %1267 = vmatprep.mubr.bf16.mxu0 0
        %1268 = vmatmul.mubr.bf16.gmra.mrb[0].mxu0 %v1192
        %v1269 = vpop.f32.mrb[0].mxu0
        %v1270 = vadd.f32 0.0, %v1269
        %v1271 = vpop.f32.mrb[0].mxu0
        %v1272 = vpop.f32.mrb[0].mxu0
        %v1273 = vadd.f32 0.0, %v1272
        %v1274 = vpop.f32.mrb[0].mxu0
        %1275 = vmatprep.mubr.bf16.mxu0 0
        %1276 = vmatmul.mubr.bf16.gmra.mrb[0].mxu0 %v1195
        %v1277 = vpop.f32.mrb[0].mxu0
        %v1278 = vadd.f32 0.0, %v1277
        %v1279 = vpop.f32.mrb[0].mxu0
        %v1280 = vpop.f32.mrb[0].mxu0
        %v1281 = vadd.f32 0.0, %v1280
        %v1282 = vpop.f32.mrb[0].mxu0
        %1283 = vmatprep.mubr.bf16.mxu0 0
        %1284 = vmatmul.mubr.bf16.gmra.mrb[0].mxu0 %v1198
        %v1285 = vpop.f32.mrb[0].mxu0
        %v1286 = vadd.f32 0.0, %v1285
        %v1287 = vpop.f32.mrb[0].mxu0
        %v1288 = vpop.f32.mrb[0].mxu0
        %v1289 = vadd.f32 0.0, %v1288
        %v1290 = vpop.f32.mrb[0].mxu0
        %1291 = vmatprep.mubr.bf16.mxu0 0
        %1292 = vmatmul.mubr.bf16.gmra.mrb[0].mxu0 %v1201
        %v1293 = vpop.f32.mrb[0].mxu0
        %v1294 = vadd.f32 0.0, %v1293
        %v1295 = vpop.f32.mrb[0].mxu0
        %v1296 = vpop.f32.mrb[0].mxu0
        %v1297 = vadd.f32 0.0, %v1296
        %v1298 = vpop.f32.mrb[0].mxu0
        %1299 = vdwg.mxu0
        %1300 = vmax.xlane.f32.xlu0 %v1238
        %v1301 = vpop.xlane.xlu0 %1300
        %1302 = vmax.xlane.f32.xlu0 %v1241
        %v1303 = vpop.xlane.xlu0 %1302
        %1304 = vmax.xlane.f32.xlu0 %v1246
        %v1305 = vpop.xlane.xlu0 %1304
        %1306 = vmax.xlane.f32.xlu0 %v1249
        %v1307 = vpop.xlane.xlu0 %1306
        %1308 = vmax.xlane.f32.xlu0 %v1254
        %v1309 = vpop.xlane.xlu0 %1308
        %1310 = vmax.xlane.f32.xlu0 %v1257
        %v1311 = vpop.xlane.xlu0 %1310
        %1312 = vmax.xlane.f32.xlu0 %v1262
        %v1313 = vpop.xlane.xlu0 %1312
        %1314 = vmax.xlane.f32.xlu0 %v1265
        %v1315 = vpop.xlane.xlu0 %1314
        %1316 = vmax.xlane.f32.xlu0 %v1270
        %v1317 = vpop.xlane.xlu0 %1316
        %1318 = vmax.xlane.f32.xlu0 %v1273
        %v1319 = vpop.xlane.xlu0 %1318
        %1320 = vmax.xlane.f32.xlu0 %v1278
        %v1321 = vpop.xlane.xlu0 %1320
        %1322 = vmax.xlane.f32.xlu0 %v1281
        %v1323 = vpop.xlane.xlu0 %1322
        %1324 = vmax.xlane.f32.xlu0 %v1286
        %v1325 = vpop.xlane.xlu0 %1324
        %1326 = vmax.xlane.f32.xlu0 %v1289
        %v1327 = vpop.xlane.xlu0 %1326
        %1328 = vmax.xlane.f32.xlu0 %v1294
        %v1329 = vpop.xlane.xlu0 %1328
        %1330 = vmax.xlane.f32.xlu0 %v1297
        %v1331 = vpop.xlane.xlu0 %1330
        %v1332 = vsub.f32 %v1238, %v1301
        %v1333 = vsub.f32 %v1241, %v1303
        %v1334 = vsub.f32 %v1246, %v1305
        %v1335 = vsub.f32 %v1249, %v1307
        %v1336 = vsub.f32 %v1254, %v1309
        %v1337 = vsub.f32 %v1257, %v1311
        %v1338 = vsub.f32 %v1262, %v1313
        %v1339 = vsub.f32 %v1265, %v1315
        %v1340 = vsub.f32 %v1270, %v1317
        %v1341 = vsub.f32 %v1273, %v1319
        %v1342 = vsub.f32 %v1278, %v1321
        %v1343 = vsub.f32 %v1281, %v1323
        %v1344 = vsub.f32 %v1286, %v1325
        %v1345 = vsub.f32 %v1289, %v1327
        %v1346 = vsub.f32 %v1294, %v1329
        %v1347 = vsub.f32 %v1297, %v1331
        %v1348 = vmul.f32 %v1332, 1.442695
        %v1349 = vpow.pop %v1348
        %v1350 = vmul.f32 %v1333, 1.442695
        %v1351 = vpow.pop %v1350
        %v1352 = vmul.f32 %v1334, 1.442695
        %v1353 = vpow.pop %v1352
        %v1354 = vmul.f32 %v1335, 1.442695
        %v1355 = vpow.pop %v1354
        %v1356 = vmul.f32 %v1336, 1.442695
        %v1357 = vpow.pop %v1356
        %v1358 = vmul.f32 %v1337, 1.442695
        %v1359 = vpow.pop %v1358
        %v1360 = vmul.f32 %v1338, 1.442695
        %v1361 = vpow.pop %v1360
        %v1362 = vmul.f32 %v1339, 1.442695
        %v1363 = vpow.pop %v1362
        %v1364 = vmul.f32 %v1340, 1.442695
        %v1365 = vpow.pop %v1364
        %v1366 = vmul.f32 %v1341, 1.442695
        %v1367 = vpow.pop %v1366
        %v1368 = vmul.f32 %v1342, 1.442695
        %v1369 = vpow.pop %v1368
        %v1370 = vmul.f32 %v1343, 1.442695
        %v1371 = vpow.pop %v1370
        %v1372 = vmul.f32 %v1344, 1.442695
        %v1373 = vpow.pop %v1372
        %v1374 = vmul.f32 %v1345, 1.442695
        %v1375 = vpow.pop %v1374
        %v1376 = vmul.f32 %v1346, 1.442695
        %v1377 = vpow.pop %v1376
        %v1378 = vmul.f32 %v1347, 1.442695
        %v1379 = vpow.pop %v1378
        %1380 = vadd.xlane.f32.xlu0 %v1349
        %v1381 = vpop.xlane.xlu0 %1380
        %1382 = vadd.xlane.f32.xlu0 %v1351
        %v1383 = vpop.xlane.xlu0 %1382
        %1384 = vadd.xlane.f32.xlu0 %v1353
        %v1385 = vpop.xlane.xlu0 %1384
        %1386 = vadd.xlane.f32.xlu0 %v1355
        %v1387 = vpop.xlane.xlu0 %1386
        %1388 = vadd.xlane.f32.xlu0 %v1357
        %v1389 = vpop.xlane.xlu0 %1388
        %1390 = vadd.xlane.f32.xlu0 %v1359
        %v1391 = vpop.xlane.xlu0 %1390
        %1392 = vadd.xlane.f32.xlu0 %v1361
        %v1393 = vpop.xlane.xlu0 %1392
        %1394 = vadd.xlane.f32.xlu0 %v1363
        %v1395 = vpop.xlane.xlu0 %1394
        %1396 = vadd.xlane.f32.xlu0 %v1365
        %v1397 = vpop.xlane.xlu0 %1396
        %1398 = vadd.xlane.f32.xlu0 %v1367
        %v1399 = vpop.xlane.xlu0 %1398
        %1400 = vadd.xlane.f32.xlu0 %v1369
        %v1401 = vpop.xlane.xlu0 %1400
        %1402 = vadd.xlane.f32.xlu0 %v1371
        %v1403 = vpop.xlane.xlu0 %1402
        %1404 = vadd.xlane.f32.xlu0 %v1373
        %v1405 = vpop.xlane.xlu0 %1404
        %1406 = vadd.xlane.f32.xlu0 %v1375
        %v1407 = vpop.xlane.xlu0 %1406
        %1408 = vadd.xlane.f32.xlu0 %v1377
        %v1409 = vpop.xlane.xlu0 %1408
        %1410 = vadd.xlane.f32.xlu0 %v1379
        %v1411 = vpop.xlane.xlu0 %1410
        %v1412 = vpack.c.bf16 %v1351, %v1349
        %v1413 = vpack.c.bf16 %v1355, %v1353
        %v1414 = vpack.c.bf16 %v1359, %v1357
        %v1415 = vpack.c.bf16 %v1363, %v1361
        %v1416 = vpack.c.bf16 %v1367, %v1365
        %v1417 = vpack.c.bf16 %v1371, %v1369
        %v1418 = vpack.c.bf16 %v1375, %v1373
        %v1419 = vpack.c.bf16 %v1379, %v1377
        %1420 = vmatprep.subr.bf16.mxu0 0
        %1421 = vmatpush1.bf16.msra.mxu0 %v677
        %1422 = vmatprep.subr.bf16.mxu0 0
        %1423 = vmatpush1.bf16.msra.mxu0 %v678
        %1424 = vmatprep.subr.bf16.mxu0 0
        %1425 = vmatpush1.bf16.msra.mxu0 %v679
        %1426 = vmatprep.subr.bf16.mxu0 0
        %1427 = vmatpush1.bf16.msra.mxu0 %v680
        %1428 = vmatprep.subr.bf16.mxu0 0
        %1429 = vmatpush1.bf16.msra.mxu0 %v681
        %1430 = vmatprep.subr.bf16.mxu0 0
        %1431 = vmatpush1.bf16.msra.mxu0 %v682
        %1432 = vmatprep.subr.bf16.mxu0 0
        %1433 = vmatpush1.bf16.msra.mxu0 %v683
        %1434 = vmatprep.subr.bf16.mxu0 0
        %1435 = vmatpush1.bf16.msra.mxu0 %v684
        %1436 = vmatprep.subr.bf16.mxu0 0
        %1437 = vmatpush1.bf16.msra.mxu0 0
        %1438 = vmatprep.subr.bf16.mxu0 0
        %1439 = vmatpush1.bf16.msra.mxu0 0
        %1440 = vmatprep.subr.bf16.mxu0 0
        %1441 = vmatpush1.bf16.msra.mxu0 0
        %1442 = vmatprep.subr.bf16.mxu0 0
        %1443 = vmatpush1.bf16.msra.mxu0 0
        %1444 = vmatprep.subr.bf16.mxu0 0
        %1445 = vmatpush1.bf16.msra.mxu0 0
        %1446 = vmatprep.subr.bf16.mxu0 0
        %1447 = vmatpush1.bf16.msra.mxu0 0
        %1448 = vmatprep.subr.bf16.mxu0 0
        %1449 = vmatpush1.bf16.msra.mxu0 0
        %1450 = vmatprep.subr.bf16.mxu0 0
        %1451 = vmatpush1.bf16.msra.mxu0 0
        %1452 = vmatprep.mubr.bf16.mxu0 0
        %1453 = vmatmul.mubr.bf16.gmra.mrb[0].mxu0 %v1412
        %v1454 = vpop.f32.mrb[0].mxu0
        %v1455 = vadd.f32 0.0, %v1454
        %v1456 = vpop.f32.mrb[0].mxu0
        %v1457 = vpop.f32.mrb[0].mxu0
        %v1458 = vadd.f32 0.0, %v1457
        %v1459 = vpop.f32.mrb[0].mxu0
        %1460 = vmatprep.mubr.bf16.mxu0 0
        %1461 = vmatmul.mubr.bf16.gmra.mrb[0].mxu0 %v1413
        %v1462 = vpop.f32.mrb[0].mxu0
        %v1463 = vadd.f32 0.0, %v1462
        %v1464 = vpop.f32.mrb[0].mxu0
        %v1465 = vpop.f32.mrb[0].mxu0
        %v1466 = vadd.f32 0.0, %v1465
        %v1467 = vpop.f32.mrb[0].mxu0
        %1468 = vmatprep.mubr.bf16.mxu0 0
        %1469 = vmatmul.mubr.bf16.gmra.mrb[0].mxu0 %v1414
        %v1470 = vpop.f32.mrb[0].mxu0
        %v1471 = vadd.f32 0.0, %v1470
        %v1472 = vpop.f32.mrb[0].mxu0
        %v1473 = vpop.f32.mrb[0].mxu0
        %v1474 = vadd.f32 0.0, %v1473
        %v1475 = vpop.f32.mrb[0].mxu0
        %1476 = vmatprep.mubr.bf16.mxu0 0
        %1477 = vmatmul.mubr.bf16.gmra.mrb[0].mxu0 %v1415
        %v1478 = vpop.f32.mrb[0].mxu0
        %v1479 = vadd.f32 0.0, %v1478
        %v1480 = vpop.f32.mrb[0].mxu0
        %v1481 = vpop.f32.mrb[0].mxu0
        %v1482 = vadd.f32 0.0, %v1481
        %v1483 = vpop.f32.mrb[0].mxu0
        %1484 = vmatprep.mubr.bf16.mxu0 0
        %1485 = vmatmul.mubr.bf16.gmra.mrb[0].mxu0 %v1416
        %v1486 = vpop.f32.mrb[0].mxu0
        %v1487 = vadd.f32 0.0, %v1486
        %v1488 = vpop.f32.mrb[0].mxu0
        %v1489 = vpop.f32.mrb[0].mxu0
        %v1490 = vadd.f32 0.0, %v1489
        %v1491 = vpop.f32.mrb[0].mxu0
        %1492 = vmatprep.mubr.bf16.mxu0 0
        %1493 = vmatmul.mubr.bf16.gmra.mrb[0].mxu0 %v1417
        %v1494 = vpop.f32.mrb[0].mxu0
        %v1495 = vadd.f32 0.0, %v1494
        %v1496 = vpop.f32.mrb[0].mxu0
        %v1497 = vpop.f32.mrb[0].mxu0
        %v1498 = vadd.f32 0.0, %v1497
        %v1499 = vpop.f32.mrb[0].mxu0
        %1500 = vmatprep.mubr.bf16.mxu0 0
        %1501 = vmatmul.mubr.bf16.gmra.mrb[0].mxu0 %v1418
        %v1502 = vpop.f32.mrb[0].mxu0
        %v1503 = vadd.f32 0.0, %v1502
        %v1504 = vpop.f32.mrb[0].mxu0
        %v1505 = vpop.f32.mrb[0].mxu0
        %v1506 = vadd.f32 0.0, %v1505
        %v1507 = vpop.f32.mrb[0].mxu0
        %1508 = vmatprep.mubr.bf16.mxu0 0
        %1509 = vmatmul.mubr.bf16.gmra.mrb[0].mxu0 %v1419
        %v1510 = vpop.f32.mrb[0].mxu0
        %v1511 = vadd.f32 0.0, %v1510
        %v1512 = vpop.f32.mrb[0].mxu0
        %v1513 = vpop.f32.mrb[0].mxu0
        %v1514 = vadd.f32 0.0, %v1513
        %v1515 = vpop.f32.mrb[0].mxu0
        %1516 = vdwg.mxu0
        %1525 = vrot.lane.b32.xlu0 %v669, 64
        %v1526 = vpop.permute.xlu0 %1525
        %1527 = vrot.lane.b32.xlu0 %v670, 64
        %v1528 = vpop.permute.xlu0 %1527
        %1529 = vrot.lane.b32.xlu0 %v671, 64
        %v1530 = vpop.permute.xlu0 %1529
        %1531 = vrot.lane.b32.xlu0 %v672, 64
        %v1532 = vpop.permute.xlu0 %1531
        %1533 = vrot.lane.b32.xlu0 %v673, 64
        %v1534 = vpop.permute.xlu0 %1533
        %1535 = vrot.lane.b32.xlu0 %v674, 64
        %v1536 = vpop.permute.xlu0 %1535
        %1537 = vrot.lane.b32.xlu0 %v675, 64
        %v1538 = vpop.permute.xlu0 %1537
        %1539 = vrot.lane.b32.xlu0 %v676, 64
        %v1540 = vpop.permute.xlu0 %1539
        %v1542 = vsel %vm752, %v1526, 0
        %v1545 = vsel %vm752, %v1528, 0
        %v1548 = vsel %vm752, %v1530, 0
        %v1551 = vsel %vm752, %v1532, 0
        %v1554 = vsel %vm752, %v1534, 0
        %v1557 = vsel %vm752, %v1536, 0
        %v1560 = vsel %vm752, %v1538, 0
        %v1563 = vsel %vm752, %v1540, 0
        %1565 = vmatprep.subr.bf16.mxu0 0
        %1566 = vmatpush1.bf16.xpose.msra.mxu0 %v1542
        %1567 = vmatprep.subr.bf16.mxu0 0
        %1568 = vmatpush1.bf16.xpose.msra.mxu0 %v1545
        %1569 = vmatprep.subr.bf16.mxu0 0
        %1570 = vmatpush1.bf16.xpose.msra.mxu0 %v1548
        %1571 = vmatprep.subr.bf16.mxu0 0
        %1572 = vmatpush1.bf16.xpose.msra.mxu0 %v1551
        %1573 = vmatprep.subr.bf16.mxu0 0
        %1574 = vmatpush1.bf16.xpose.msra.mxu0 %v1554
        %1575 = vmatprep.subr.bf16.mxu0 0
        %1576 = vmatpush1.bf16.xpose.msra.mxu0 %v1557
        %1577 = vmatprep.subr.bf16.mxu0 0
        %1578 = vmatpush1.bf16.xpose.msra.mxu0 %v1560
        %1579 = vmatprep.subr.bf16.mxu0 0
        %1580 = vmatpush1.bf16.xpose.msra.mxu0 %v1563
        %1581 = vmatprep.subr.bf16.mxu0 0
        %1582 = vmatpush1.bf16.xpose.msra.mxu0 0
        %1583 = vmatprep.subr.bf16.mxu0 0
        %1584 = vmatpush1.bf16.xpose.msra.mxu0 0
        %1585 = vmatprep.subr.bf16.mxu0 0
        %1586 = vmatpush1.bf16.xpose.msra.mxu0 0
        %1587 = vmatprep.subr.bf16.mxu0 0
        %1588 = vmatpush1.bf16.xpose.msra.mxu0 0
        %1589 = vmatprep.subr.bf16.mxu0 0
        %1590 = vmatpush1.bf16.xpose.msra.mxu0 0
        %1591 = vmatprep.subr.bf16.mxu0 0
        %1592 = vmatpush1.bf16.xpose.msra.mxu0 0
        %1593 = vmatprep.subr.bf16.mxu0 0
        %1594 = vmatpush1.bf16.xpose.msra.mxu0 0
        %1595 = vmatprep.subr.bf16.mxu0 0
        %1596 = vmatpush1.bf16.xpose.msra.mxu0 0
        %1597 = vmatprep.mubr.bf16.mxu0 0
        %1598 = vmatmul.mubr.bf16.gmra.mrb[0].mxu0 %v1180
        %v1599 = vpop.f32.mrb[0].mxu0
        %v1600 = vadd.f32 0.0, %v1599
        %v1601 = vpop.f32.mrb[0].mxu0
        %v1602 = vpop.f32.mrb[0].mxu0
        %v1603 = vadd.f32 0.0, %v1602
        %v1604 = vpop.f32.mrb[0].mxu0
        %1605 = vmatprep.mubr.bf16.mxu0 0
        %1606 = vmatmul.mubr.bf16.gmra.mrb[0].mxu0 %v1183
        %v1607 = vpop.f32.mrb[0].mxu0
        %v1608 = vadd.f32 0.0, %v1607
        %v1609 = vpop.f32.mrb[0].mxu0
        %v1610 = vpop.f32.mrb[0].mxu0
        %v1611 = vadd.f32 0.0, %v1610
        %v1612 = vpop.f32.mrb[0].mxu0
        %1613 = vmatprep.mubr.bf16.mxu0 0
        %1614 = vmatmul.mubr.bf16.gmra.mrb[0].mxu0 %v1186
        %v1615 = vpop.f32.mrb[0].mxu0
        %v1616 = vadd.f32 0.0, %v1615
        %v1617 = vpop.f32.mrb[0].mxu0
        %v1618 = vpop.f32.mrb[0].mxu0
        %v1619 = vadd.f32 0.0, %v1618
        %v1620 = vpop.f32.mrb[0].mxu0
        %1621 = vmatprep.mubr.bf16.mxu0 0
        %1622 = vmatmul.mubr.bf16.gmra.mrb[0].mxu0 %v1189
        %v1623 = vpop.f32.mrb[0].mxu0
        %v1624 = vadd.f32 0.0, %v1623
        %v1625 = vpop.f32.mrb[0].mxu0
        %v1626 = vpop.f32.mrb[0].mxu0
        %v1627 = vadd.f32 0.0, %v1626
        %v1628 = vpop.f32.mrb[0].mxu0
        %1629 = vmatprep.mubr.bf16.mxu0 0
        %1630 = vmatmul.mubr.bf16.gmra.mrb[0].mxu0 %v1192
        %v1631 = vpop.f32.mrb[0].mxu0
        %v1632 = vadd.f32 0.0, %v1631
        %v1633 = vpop.f32.mrb[0].mxu0
        %v1634 = vpop.f32.mrb[0].mxu0
        %v1635 = vadd.f32 0.0, %v1634
        %v1636 = vpop.f32.mrb[0].mxu0
        %1637 = vmatprep.mubr.bf16.mxu0 0
        %1638 = vmatmul.mubr.bf16.gmra.mrb[0].mxu0 %v1195
        %v1639 = vpop.f32.mrb[0].mxu0
        %v1640 = vadd.f32 0.0, %v1639
        %v1641 = vpop.f32.mrb[0].mxu0
        %v1642 = vpop.f32.mrb[0].mxu0
        %v1643 = vadd.f32 0.0, %v1642
        %v1644 = vpop.f32.mrb[0].mxu0
        %1645 = vmatprep.mubr.bf16.mxu0 0
        %1646 = vmatmul.mubr.bf16.gmra.mrb[0].mxu0 %v1198
        %v1647 = vpop.f32.mrb[0].mxu0
        %v1648 = vadd.f32 0.0, %v1647
        %v1649 = vpop.f32.mrb[0].mxu0
        %v1650 = vpop.f32.mrb[0].mxu0
        %v1651 = vadd.f32 0.0, %v1650
        %v1652 = vpop.f32.mrb[0].mxu0
        %1653 = vmatprep.mubr.bf16.mxu0 0
        %1654 = vmatmul.mubr.bf16.gmra.mrb[0].mxu0 %v1201
        %v1655 = vpop.f32.mrb[0].mxu0
        %v1656 = vadd.f32 0.0, %v1655
        %v1657 = vpop.f32.mrb[0].mxu0
        %v1658 = vpop.f32.mrb[0].mxu0
        %v1659 = vadd.f32 0.0, %v1658
        %v1660 = vpop.f32.mrb[0].mxu0
        %1661 = vdwg.mxu0
        %v1662 = vsel %vm712, %v1600, -inf
        %v1663 = vsel %vm713, %v1603, -inf
        %v1664 = vsel %vm714, %v1608, -inf
        %v1665 = vsel %vm715, %v1611, -inf
        %v1666 = vsel %vm716, %v1616, -inf
        %v1667 = vsel %vm717, %v1619, -inf
        %v1668 = vsel %vm718, %v1624, -inf
        %v1669 = vsel %vm719, %v1627, -inf
        %v1670 = vsel %vm720, %v1632, -inf
        %v1671 = vsel %vm721, %v1635, -inf
        %v1672 = vsel %vm722, %v1640, -inf
        %v1673 = vsel %vm723, %v1643, -inf
        %v1674 = vsel %vm724, %v1648, -inf
        %v1675 = vsel %vm725, %v1651, -inf
        %v1676 = vsel %vm726, %v1656, -inf
        %v1677 = vsel %vm727, %v1659, -inf
        %1678 = vmax.xlane.f32.xlu0 %v1662
        %v1679 = vpop.xlane.xlu0 %1678
        %1680 = vmax.xlane.f32.xlu0 %v1663
        %v1681 = vpop.xlane.xlu0 %1680
        %1682 = vmax.xlane.f32.xlu0 %v1664
        %v1683 = vpop.xlane.xlu0 %1682
        %1684 = vmax.xlane.f32.xlu0 %v1665
        %v1685 = vpop.xlane.xlu0 %1684
        %1686 = vmax.xlane.f32.xlu0 %v1666
        %v1687 = vpop.xlane.xlu0 %1686
        %1688 = vmax.xlane.f32.xlu0 %v1667
        %v1689 = vpop.xlane.xlu0 %1688
        %1690 = vmax.xlane.f32.xlu0 %v1668
        %v1691 = vpop.xlane.xlu0 %1690
        %1692 = vmax.xlane.f32.xlu0 %v1669
        %v1693 = vpop.xlane.xlu0 %1692
        %1694 = vmax.xlane.f32.xlu0 %v1670
        %v1695 = vpop.xlane.xlu0 %1694
        %1696 = vmax.xlane.f32.xlu0 %v1671
        %v1697 = vpop.xlane.xlu0 %1696
        %1698 = vmax.xlane.f32.xlu0 %v1672
        %v1699 = vpop.xlane.xlu0 %1698
        %1700 = vmax.xlane.f32.xlu0 %v1673
        %v1701 = vpop.xlane.xlu0 %1700
        %1702 = vmax.xlane.f32.xlu0 %v1674
        %v1703 = vpop.xlane.xlu0 %1702
        %1704 = vmax.xlane.f32.xlu0 %v1675
        %v1705 = vpop.xlane.xlu0 %1704
        %1706 = vmax.xlane.f32.xlu0 %v1676
        %v1707 = vpop.xlane.xlu0 %1706
        %1708 = vmax.xlane.f32.xlu0 %v1677
        %v1709 = vpop.xlane.xlu0 %1708
        %v1710 = vmax.f32 %v1301, %v1679
        %v1711 = vmax.f32 %v1303, %v1681
        %v1712 = vmax.f32 %v1305, %v1683
        %v1713 = vmax.f32 %v1307, %v1685
        %v1714 = vmax.f32 %v1309, %v1687
        %v1715 = vmax.f32 %v1311, %v1689
        %v1716 = vmax.f32 %v1313, %v1691
        %v1717 = vmax.f32 %v1315, %v1693
        %v1718 = vmax.f32 %v1317, %v1695
        %v1719 = vmax.f32 %v1319, %v1697
        %v1720 = vmax.f32 %v1321, %v1699
        %v1721 = vmax.f32 %v1323, %v1701
        %v1722 = vmax.f32 %v1325, %v1703
        %v1723 = vmax.f32 %v1327, %v1705
        %v1724 = vmax.f32 %v1329, %v1707
        %v1725 = vmax.f32 %v1331, %v1709
        %v1726 = vsub.f32 %v1301, %v1710
        %v1727 = vsub.f32 %v1303, %v1711
        %v1728 = vsub.f32 %v1305, %v1712
        %v1729 = vsub.f32 %v1307, %v1713
        %v1730 = vsub.f32 %v1309, %v1714
        %v1731 = vsub.f32 %v1311, %v1715
        %v1732 = vsub.f32 %v1313, %v1716
        %v1733 = vsub.f32 %v1315, %v1717
        %v1734 = vsub.f32 %v1317, %v1718
        %v1735 = vsub.f32 %v1319, %v1719
        %v1736 = vsub.f32 %v1321, %v1720
        %v1737 = vsub.f32 %v1323, %v1721
        %v1738 = vsub.f32 %v1325, %v1722
        %v1739 = vsub.f32 %v1327, %v1723
        %v1740 = vsub.f32 %v1329, %v1724
        %v1741 = vsub.f32 %v1331, %v1725
        %v1742 = vmul.f32 %v1726, 1.442695
        %v1743 = vpow.pop %v1742
        %v1744 = vmul.f32 %v1727, 1.442695
        %v1745 = vpow.pop %v1744
        %v1746 = vmul.f32 %v1728, 1.442695
        %v1747 = vpow.pop %v1746
        %v1748 = vmul.f32 %v1729, 1.442695
        %v1749 = vpow.pop %v1748
        %v1750 = vmul.f32 %v1730, 1.442695
        %v1751 = vpow.pop %v1750
        %v1752 = vmul.f32 %v1731, 1.442695
        %v1753 = vpow.pop %v1752
        %v1754 = vmul.f32 %v1732, 1.442695
        %v1755 = vpow.pop %v1754
        %v1756 = vmul.f32 %v1733, 1.442695
        %v1757 = vpow.pop %v1756
        %v1758 = vmul.f32 %v1734, 1.442695
        %v1759 = vpow.pop %v1758
        %v1760 = vmul.f32 %v1735, 1.442695
        %v1761 = vpow.pop %v1760
        %v1762 = vmul.f32 %v1736, 1.442695
        %v1763 = vpow.pop %v1762
        %v1764 = vmul.f32 %v1737, 1.442695
        %v1765 = vpow.pop %v1764
        %v1766 = vmul.f32 %v1738, 1.442695
        %v1767 = vpow.pop %v1766
        %v1768 = vmul.f32 %v1739, 1.442695
        %v1769 = vpow.pop %v1768
        %v1770 = vmul.f32 %v1740, 1.442695
        %v1771 = vpow.pop %v1770
        %v1772 = vmul.f32 %v1741, 1.442695
        %v1773 = vpow.pop %v1772
        %v1774 = vsub.f32 %v1662, %v1710
        %v1775 = vsub.f32 %v1663, %v1711
        %v1776 = vsub.f32 %v1664, %v1712
        %v1777 = vsub.f32 %v1665, %v1713
        %v1778 = vsub.f32 %v1666, %v1714
        %v1779 = vsub.f32 %v1667, %v1715
        %v1780 = vsub.f32 %v1668, %v1716
        %v1781 = vsub.f32 %v1669, %v1717
        %v1782 = vsub.f32 %v1670, %v1718
        %v1783 = vsub.f32 %v1671, %v1719
        %v1784 = vsub.f32 %v1672, %v1720
        %v1785 = vsub.f32 %v1673, %v1721
        %v1786 = vsub.f32 %v1674, %v1722
        %v1787 = vsub.f32 %v1675, %v1723
        %v1788 = vsub.f32 %v1676, %v1724
        %v1789 = vsub.f32 %v1677, %v1725
        %v1790 = vmul.f32 %v1774, 1.442695
        %v1791 = vpow.pop %v1790
        %v1792 = vmul.f32 %v1775, 1.442695
        %v1793 = vpow.pop %v1792
        %v1794 = vmul.f32 %v1776, 1.442695
        %v1795 = vpow.pop %v1794
        %v1796 = vmul.f32 %v1777, 1.442695
        %v1797 = vpow.pop %v1796
        %v1798 = vmul.f32 %v1778, 1.442695
        %v1799 = vpow.pop %v1798
        %v1800 = vmul.f32 %v1779, 1.442695
        %v1801 = vpow.pop %v1800
        %v1802 = vmul.f32 %v1780, 1.442695
        %v1803 = vpow.pop %v1802
        %v1804 = vmul.f32 %v1781, 1.442695
        %v1805 = vpow.pop %v1804
        %v1806 = vmul.f32 %v1782, 1.442695
        %v1807 = vpow.pop %v1806
        %v1808 = vmul.f32 %v1783, 1.442695
        %v1809 = vpow.pop %v1808
        %v1810 = vmul.f32 %v1784, 1.442695
        %v1811 = vpow.pop %v1810
        %v1812 = vmul.f32 %v1785, 1.442695
        %v1813 = vpow.pop %v1812
        %v1814 = vmul.f32 %v1786, 1.442695
        %v1815 = vpow.pop %v1814
        %v1816 = vmul.f32 %v1787, 1.442695
        %v1817 = vpow.pop %v1816
        %v1818 = vmul.f32 %v1788, 1.442695
        %v1819 = vpow.pop %v1818
        %v1820 = vmul.f32 %v1789, 1.442695
        %v1821 = vpow.pop %v1820
        %v1822 = vmul.f32 %v1743, %v1381
        %v1823 = vmul.f32 %v1745, %v1383
        %v1824 = vmul.f32 %v1747, %v1385
        %v1825 = vmul.f32 %v1749, %v1387
        %v1826 = vmul.f32 %v1751, %v1389
        %v1827 = vmul.f32 %v1753, %v1391
        %v1828 = vmul.f32 %v1755, %v1393
        %v1829 = vmul.f32 %v1757, %v1395
        %v1830 = vmul.f32 %v1759, %v1397
        %v1831 = vmul.f32 %v1761, %v1399
        %v1832 = vmul.f32 %v1763, %v1401
        %v1833 = vmul.f32 %v1765, %v1403
        %v1834 = vmul.f32 %v1767, %v1405
        %v1835 = vmul.f32 %v1769, %v1407
        %v1836 = vmul.f32 %v1771, %v1409
        %v1837 = vmul.f32 %v1773, %v1411
        %1838 = vadd.xlane.f32.xlu0 %v1791
        %v1839 = vpop.xlane.xlu0 %1838
        %1840 = vadd.xlane.f32.xlu0 %v1793
        %v1841 = vpop.xlane.xlu0 %1840
        %1842 = vadd.xlane.f32.xlu0 %v1795
        %v1843 = vpop.xlane.xlu0 %1842
        %1844 = vadd.xlane.f32.xlu0 %v1797
        %v1845 = vpop.xlane.xlu0 %1844
        %1846 = vadd.xlane.f32.xlu0 %v1799
        %v1847 = vpop.xlane.xlu0 %1846
        %1848 = vadd.xlane.f32.xlu0 %v1801
        %v1849 = vpop.xlane.xlu0 %1848
        %1850 = vadd.xlane.f32.xlu0 %v1803
        %v1851 = vpop.xlane.xlu0 %1850
        %1852 = vadd.xlane.f32.xlu0 %v1805
        %v1853 = vpop.xlane.xlu0 %1852
        %1854 = vadd.xlane.f32.xlu0 %v1807
        %v1855 = vpop.xlane.xlu0 %1854
        %1856 = vadd.xlane.f32.xlu0 %v1809
        %v1857 = vpop.xlane.xlu0 %1856
        %1858 = vadd.xlane.f32.xlu0 %v1811
        %v1859 = vpop.xlane.xlu0 %1858
        %1860 = vadd.xlane.f32.xlu0 %v1813
        %v1861 = vpop.xlane.xlu0 %1860
        %1862 = vadd.xlane.f32.xlu0 %v1815
        %v1863 = vpop.xlane.xlu0 %1862
        %1864 = vadd.xlane.f32.xlu0 %v1817
        %v1865 = vpop.xlane.xlu0 %1864
        %1866 = vadd.xlane.f32.xlu0 %v1819
        %v1867 = vpop.xlane.xlu0 %1866
        %1868 = vadd.xlane.f32.xlu0 %v1821
        %v1869 = vpop.xlane.xlu0 %1868
        %v1870 = vadd.f32 %v1822, %v1839
        %v1871 = vadd.f32 %v1823, %v1841
        %v1872 = vadd.f32 %v1824, %v1843
        %v1873 = vadd.f32 %v1825, %v1845
        %v1874 = vadd.f32 %v1826, %v1847
        %v1875 = vadd.f32 %v1827, %v1849
        %v1876 = vadd.f32 %v1828, %v1851
        %v1877 = vadd.f32 %v1829, %v1853
        %v1878 = vadd.f32 %v1830, %v1855
        %v1879 = vadd.f32 %v1831, %v1857
        %v1880 = vadd.f32 %v1832, %v1859
        %v1881 = vadd.f32 %v1833, %v1861
        %v1882 = vadd.f32 %v1834, %v1863
        %v1883 = vadd.f32 %v1835, %v1865
        %v1884 = vadd.f32 %v1836, %v1867
        %v1885 = vadd.f32 %v1837, %v1869
        %v1886 = vmul.f32 %v1743, %v1455
        %v1887 = vmul.f32 %v1745, %v1458
        %v1888 = vmul.f32 %v1747, %v1463
        %v1889 = vmul.f32 %v1749, %v1466
        %v1890 = vmul.f32 %v1751, %v1471
        %v1891 = vmul.f32 %v1753, %v1474
        %v1892 = vmul.f32 %v1755, %v1479
        %v1893 = vmul.f32 %v1757, %v1482
        %v1894 = vmul.f32 %v1759, %v1487
        %v1895 = vmul.f32 %v1761, %v1490
        %v1896 = vmul.f32 %v1763, %v1495
        %v1897 = vmul.f32 %v1765, %v1498
        %v1898 = vmul.f32 %v1767, %v1503
        %v1899 = vmul.f32 %v1769, %v1506
        %v1900 = vmul.f32 %v1771, %v1511
        %v1901 = vmul.f32 %v1773, %v1514
        %v1902 = vpack.c.bf16 %v1793, %v1791
        %v1903 = vpack.c.bf16 %v1797, %v1795
        %v1904 = vpack.c.bf16 %v1801, %v1799
        %v1905 = vpack.c.bf16 %v1805, %v1803
        %v1906 = vpack.c.bf16 %v1809, %v1807
        %v1907 = vpack.c.bf16 %v1813, %v1811
        %v1908 = vpack.c.bf16 %v1817, %v1815
        %v1909 = vpack.c.bf16 %v1821, %v1819
        %1910 = vmatprep.subr.bf16.mxu0 0
        %1911 = vmatpush1.bf16.msra.mxu0 %v685
        %1912 = vmatprep.subr.bf16.mxu0 0
        %1913 = vmatpush1.bf16.msra.mxu0 %v686
        %1914 = vmatprep.subr.bf16.mxu0 0
        %1915 = vmatpush1.bf16.msra.mxu0 %v687
        %1916 = vmatprep.subr.bf16.mxu0 0
        %1917 = vmatpush1.bf16.msra.mxu0 %v688
        %1918 = vmatprep.subr.bf16.mxu0 0
        %1919 = vmatpush1.bf16.msra.mxu0 %v689
        %1920 = vmatprep.subr.bf16.mxu0 0
        %1921 = vmatpush1.bf16.msra.mxu0 %v690
        %1922 = vmatprep.subr.bf16.mxu0 0
        %1923 = vmatpush1.bf16.msra.mxu0 %v691
        %1924 = vmatprep.subr.bf16.mxu0 0
        %1925 = vmatpush1.bf16.msra.mxu0 %v692
        %1926 = vmatprep.subr.bf16.mxu0 0
        %1927 = vmatpush1.bf16.msra.mxu0 0
        %1928 = vmatprep.subr.bf16.mxu0 0
        %1929 = vmatpush1.bf16.msra.mxu0 0
        %1930 = vmatprep.subr.bf16.mxu0 0
        %1931 = vmatpush1.bf16.msra.mxu0 0
        %1932 = vmatprep.subr.bf16.mxu0 0
        %1933 = vmatpush1.bf16.msra.mxu0 0
        %1934 = vmatprep.subr.bf16.mxu0 0
        %1935 = vmatpush1.bf16.msra.mxu0 0
        %1936 = vmatprep.subr.bf16.mxu0 0
        %1937 = vmatpush1.bf16.msra.mxu0 0
        %1938 = vmatprep.subr.bf16.mxu0 0
        %1939 = vmatpush1.bf16.msra.mxu0 0
        %1940 = vmatprep.subr.bf16.mxu0 0
        %1941 = vmatpush1.bf16.msra.mxu0 0
        %1942 = vmatprep.mubr.bf16.mxu0 0
        %1943 = vmatmul.mubr.bf16.gmra.mrb[0].mxu0 %v1902
        %v1944 = vpop.f32.mrb[0].mxu0
        %v1945 = vadd.f32 0.0, %v1944
        %v1946 = vpop.f32.mrb[0].mxu0
        %v1947 = vpop.f32.mrb[0].mxu0
        %v1948 = vadd.f32 0.0, %v1947
        %v1949 = vpop.f32.mrb[0].mxu0
        %1950 = vmatprep.mubr.bf16.mxu0 0
        %1951 = vmatmul.mubr.bf16.gmra.mrb[0].mxu0 %v1903
        %v1952 = vpop.f32.mrb[0].mxu0
        %v1953 = vadd.f32 0.0, %v1952
        %v1954 = vpop.f32.mrb[0].mxu0
        %v1955 = vpop.f32.mrb[0].mxu0
        %v1956 = vadd.f32 0.0, %v1955
        %v1957 = vpop.f32.mrb[0].mxu0
        %1958 = vmatprep.mubr.bf16.mxu0 0
        %1959 = vmatmul.mubr.bf16.gmra.mrb[0].mxu0 %v1904
        %v1960 = vpop.f32.mrb[0].mxu0
        %v1961 = vadd.f32 0.0, %v1960
        %v1962 = vpop.f32.mrb[0].mxu0
        %v1963 = vpop.f32.mrb[0].mxu0
        %v1964 = vadd.f32 0.0, %v1963
        %v1965 = vpop.f32.mrb[0].mxu0
        %1966 = vmatprep.mubr.bf16.mxu0 0
        %1967 = vmatmul.mubr.bf16.gmra.mrb[0].mxu0 %v1905
        %v1968 = vpop.f32.mrb[0].mxu0
        %v1969 = vadd.f32 0.0, %v1968
        %v1970 = vpop.f32.mrb[0].mxu0
        %v1971 = vpop.f32.mrb[0].mxu0
        %v1972 = vadd.f32 0.0, %v1971
        %v1973 = vpop.f32.mrb[0].mxu0
        %1974 = vmatprep.mubr.bf16.mxu0 0
        %1975 = vmatmul.mubr.bf16.gmra.mrb[0].mxu0 %v1906
        %v1976 = vpop.f32.mrb[0].mxu0
        %v1977 = vadd.f32 0.0, %v1976
        %v1978 = vpop.f32.mrb[0].mxu0
        %v1979 = vpop.f32.mrb[0].mxu0
        %v1980 = vadd.f32 0.0, %v1979
        %v1981 = vpop.f32.mrb[0].mxu0
        %1982 = vmatprep.mubr.bf16.mxu0 0
        %1983 = vmatmul.mubr.bf16.gmra.mrb[0].mxu0 %v1907
        %v1984 = vpop.f32.mrb[0].mxu0
        %v1985 = vadd.f32 0.0, %v1984
        %v1986 = vpop.f32.mrb[0].mxu0
        %v1987 = vpop.f32.mrb[0].mxu0
        %v1988 = vadd.f32 0.0, %v1987
        %v1989 = vpop.f32.mrb[0].mxu0
        %1990 = vmatprep.mubr.bf16.mxu0 0
        %1991 = vmatmul.mubr.bf16.gmra.mrb[0].mxu0 %v1908
        %v1992 = vpop.f32.mrb[0].mxu0
        %v1993 = vadd.f32 0.0, %v1992
        %v1994 = vpop.f32.mrb[0].mxu0
        %v1995 = vpop.f32.mrb[0].mxu0
        %v1996 = vadd.f32 0.0, %v1995
        %v1997 = vpop.f32.mrb[0].mxu0
        %1998 = vmatprep.mubr.bf16.mxu0 0
        %1999 = vmatmul.mubr.bf16.gmra.mrb[0].mxu0 %v1909
        %v2000 = vpop.f32.mrb[0].mxu0
        %v2001 = vadd.f32 0.0, %v2000
        %v2002 = vpop.f32.mrb[0].mxu0
        %v2003 = vpop.f32.mrb[0].mxu0
        %v2004 = vadd.f32 0.0, %v2003
        %v2005 = vpop.f32.mrb[0].mxu0
        %2006 = vdwg.mxu0
        %v2007 = vadd.f32 %v1886, %v1945
        %v2008 = vadd.f32 %v1887, %v1948
        %v2009 = vadd.f32 %v1888, %v1953
        %v2010 = vadd.f32 %v1889, %v1956
        %v2011 = vadd.f32 %v1890, %v1961
        %v2012 = vadd.f32 %v1891, %v1964
        %v2013 = vadd.f32 %v1892, %v1969
        %v2014 = vadd.f32 %v1893, %v1972
        %v2015 = vadd.f32 %v1894, %v1977
        %v2016 = vadd.f32 %v1895, %v1980
        %v2017 = vadd.f32 %v1896, %v1985
        %v2018 = vadd.f32 %v1897, %v1988
        %v2019 = vadd.f32 %v1898, %v1993
        %v2020 = vadd.f32 %v1899, %v1996
        %v2021 = vadd.f32 %v1900, %v2001
        %v2022 = vadd.f32 %v1901, %v2004
        %v2023 = vrcp.pop %v1870
        %v2024 = vrcp.pop %v1871
        %v2025 = vrcp.pop %v1872
        %v2026 = vrcp.pop %v1873
        %v2027 = vrcp.pop %v1874
        %v2028 = vrcp.pop %v1875
        %v2029 = vrcp.pop %v1876
        %v2030 = vrcp.pop %v1877
        %v2031 = vrcp.pop %v1878
        %v2032 = vrcp.pop %v1879
        %v2033 = vrcp.pop %v1880
        %v2034 = vrcp.pop %v1881
        %v2035 = vrcp.pop %v1882
        %v2036 = vrcp.pop %v1883
        %v2037 = vrcp.pop %v1884
        %v2038 = vrcp.pop %v1885
        %v2039 = vmul.f32 %v2007, %v2023
        %v2040 = vmul.f32 %v2008, %v2024
        %v2041 = vmul.f32 %v2009, %v2025
        %v2042 = vmul.f32 %v2010, %v2026
        %v2043 = vmul.f32 %v2011, %v2027
        %v2044 = vmul.f32 %v2012, %v2028
        %v2045 = vmul.f32 %v2013, %v2029
        %v2046 = vmul.f32 %v2014, %v2030
        %v2047 = vmul.f32 %v2015, %v2031
        %v2048 = vmul.f32 %v2016, %v2032
        %v2049 = vmul.f32 %v2017, %v2033
        %v2050 = vmul.f32 %v2018, %v2034
        %v2051 = vmul.f32 %v2019, %v2035
        %v2052 = vmul.f32 %v2020, %v2036
        %v2053 = vmul.f32 %v2021, %v2037
        %v2054 = vmul.f32 %v2022, %v2038
        %2055 = vst.msk [vmem:[%s178 + $0x80] sm:$0xff] %vm752, %v2039
        %2056 = vst.msk [vmem:[%s178 + $0x88] sm:$0xff] %vm752, %v2040
        %2057 = vst.msk [vmem:[%s178 + $0x90] sm:$0xff] %vm752, %v2041
        %2058 = vst.msk [vmem:[%s178 + $0x98] sm:$0xff] %vm752, %v2042
        %2059 = vst.msk [vmem:[%s178 + $0xa0] sm:$0xff] %vm752, %v2043
        %2060 = vst.msk [vmem:[%s178 + $0xa8] sm:$0xff] %vm752, %v2044
        %2061 = vst.msk [vmem:[%s178 + $0xb0] sm:$0xff] %vm752, %v2045
        %2062 = vst.msk [vmem:[%s178 + $0xb8] sm:$0xff] %vm752, %v2046
        %2063 = vst.msk [vmem:[%s178 + $0xc0] sm:$0xff] %vm752, %v2047
        %2064 = vst.msk [vmem:[%s178 + $0xc8] sm:$0xff] %vm752, %v2048
        %2065 = vst.msk [vmem:[%s178 + $0xd0] sm:$0xff] %vm752, %v2049
        %2066 = vst.msk [vmem:[%s178 + $0xd8] sm:$0xff] %vm752, %v2050
        %2067 = vst.msk [vmem:[%s178 + $0xe0] sm:$0xff] %vm752, %v2051
        %2068 = vst.msk [vmem:[%s178 + $0xe8] sm:$0xff] %vm752, %v2052
        %2069 = vst.msk [vmem:[%s178 + $0xf0] sm:$0xff] %vm752, %v2053
        %2070 = vst.msk [vmem:[%s178 + $0xf8] sm:$0xff] %vm752, %v2054
        %p2071 = scmp.lt.s32.totalorder %s17, 1
        %s2072 = scalar_select %p2071, %s17, 1
        %s2073 = smul.addr %s2072, 32
        %s2074 = smul.addr %s2073, 8
        %s2075 = scalar_lea.vmem %s2, %s2074
        // Predicated region
        $region37: #{tpu_custom_call.1} parent=27 // pred_check
          %p2076 = pneg %p82
        $region38: #{tpu_custom_call.1} parent=27 // pred_check_branch
          %2078 = sbr.rel (%p2076) target = $region40
        $region39: #{tpu_custom_call.1} parent=27 // pred_region
          _
        $region40: #{tpu_custom_call.1} parent=27 // pred_fallthru
          _
      $region28: #{tpu_custom_call.1} parent=5 // pred_fallthru
        _
      %p2079 = scmp.le.s32.totalorder 2, %s12
      // Predicated region
      $region41: #{tpu_custom_call.1} parent=5 // pred_check
        %p2080 = pneg %p2079
      $region42: #{tpu_custom_call.1} parent=5 // pred_check_branch
        %2082 = sbr.rel (%p2080) target = $region44
      $region43: #{tpu_custom_call.1} parent=5 // pred_region
        %s2083 = ssub.s32 %s12, 2
        // Predicated region
        $region45: #{tpu_custom_call.1} parent=43 // pred_check
          %p2084 = pneg %p88
        $region46: #{tpu_custom_call.1} parent=43 // pred_check_branch
          %2086 = sbr.rel (%p2084) target = $region48
        $region47: #{tpu_custom_call.1} parent=43 // pred_region
          %p2087 = scmp.lt.s32.totalorder %s18, 1
          %s2088 = scalar_select %p2087, %s18, 1
          %s2089 = smul.addr %s2088, 32
          %s2090 = smul.addr %s2089, 8
          %s2091 = scalar_lea.vmem %s2, %s2090
        $region48: #{tpu_custom_call.1} parent=43 // pred_fallthru
          _
      $region44: #{tpu_custom_call.1} parent=5 // pred_fallthru
        _
    $region6: #{tpu_custom_call.1} parent=1 // loop_footer
      %s16 = sadd.s32 1, %s12
    $region7: #{tpu_custom_call.1} parent=1 // loop_footer_branch
      %11 = sbr.rel target = $region3
    $region8: #{tpu_custom_call.1} parent=1 // loop_exit
      _
    %2092 = vsyncpa [#allocation3], 1
    %s2093 = scalar_lea.sflag [#allocation3], 1
    %2094 = vsyncpa %s2093, 1
    %2095 = vsyncpa [#allocation5], 1

</llo_original>
